<compile_context>
chip_gen: v6e
topology: v6e:2x2x1
jax: 0.10.0
libtpu: 0.0.40
codegen_flags: <defaults>
</compile_context>

<pallas_src>
import jax
import jax.numpy as jnp
from jax.experimental import pallas as pl
from jax.experimental.pallas import tpu as pltpu


# ----------------------------- Pallas kernel -------------------------------


def ada_layer_norm_kernel(x_ref, c_ref, w_ref, b_ref, o_ref):
    """One row-tile of AdaLayerNorm.

    x_ref, c_ref, o_ref : (TM, C)   bf16 (upcast to f32 inside)
    w_ref               : (C, 2C)   bf16   (SiLU->Linear weight, pre-transposed)
    b_ref               : (1, 2C)   f32    (scale half already carries the +1)
    """
    C = x_ref.shape[-1]

    x = x_ref[...].astype(jnp.float32)  # (TM, C)
    c = c_ref[...].astype(jnp.float32)  # (TM, C)

    # LayerNorm(eps=1e-6, elementwise_affine=False): one-pass stats, f32 math.
    inv_c = 1.0 / C
    mu = jnp.sum(x, axis=-1, keepdims=True) * inv_c
    ex2 = jnp.sum(x * x, axis=-1, keepdims=True) * inv_c
    var = jnp.maximum(ex2 - mu * mu, 0.0)            # guard tiny cancellation
    x_norm = (x - mu) * jax.lax.rsqrt(var + 1e-6)    # rsqrt -> EUP slot

    # Modulation: SiLU(c) @ W + b, bf16 MXU inputs, f32 accumulation.
    silu_c = c * jax.nn.sigmoid(c)
    mod = jnp.dot(
        silu_c.astype(jnp.bfloat16), w_ref[...],
        preferred_element_type=jnp.float32,
    ) + b_ref[...]                                    # (TM, 2C)

    # chunk(2, dim=-1): [shift | scale+1]; both slices are 128-lane aligned
    # because C is a multiple of 128 (free, no VMEM copy).
    shift = mod[:, :C]
    scale1 = mod[:, C:]                               # = 1 + scale (bias fold)

    o_ref[...] = (x_norm * scale1 + shift).astype(o_ref.dtype)


# ------------------------------- wrapper ------------------------------------


def _pick_row_tile(m: int, max_tile: int = 512, min_steps: int = 4) -> int:
    """Biggest sublane-aligned row tile <= max_tile dividing M, while keeping
    at least `min_steps` grid steps (2 per TensorCore on v7x) when possible."""
    candidates = [t for t in (512, 256, 128, 64, 32, 16, 8) if t <= max_tile]
    for t in candidates:
        if m % t == 0 and m // t >= min_steps:
            return t
    for t in candidates:
        if m % t == 0:
            return t
    return m


def prep_modulation_params(w_f32, bias_f32, C):
    """One-time constant prep: bf16 weight (pre-transposed (C,2C) layout is
    assumed by the caller) and fold the '+1' of modulate() into the scale half
    of the bias."""
    w_bf16 = w_f32.astype(jnp.bfloat16)
    bias_folded = bias_f32.at[:, C:].add(1.0)
    return w_bf16, bias_folded


def ada_layer_norm_pallas(x, c, w_bf16, bias_folded_f32):
    B, N, C = x.shape
    M = B * N
    x2 = x.reshape(M, C)
    c2 = c.reshape(M, C)
    TM = _pick_row_tile(M)
    grid = (M // TM,)

    out = pl.pallas_call(
        ada_layer_norm_kernel,
        out_shape=jax.ShapeDtypeStruct((M, C), x.dtype),
        grid_spec=pltpu.PrefetchScalarGridSpec(
            num_scalar_prefetch=0,
            grid=grid,
            in_specs=[
                pl.BlockSpec((TM, C), lambda i: (i, 0)),        # x rows
                pl.BlockSpec((TM, C), lambda i: (i, 0)),        # c rows
                pl.BlockSpec((C, 2 * C), lambda i: (0, 0),      # weight (const)
                             pipeline_mode=pl.Buffered(buffer_count=1)),
                pl.BlockSpec((1, 2 * C), lambda i: (0, 0),      # bias   (const)
                             pipeline_mode=pl.Buffered(buffer_count=1)),
            ],
            out_specs=pl.BlockSpec((TM, C), lambda i: (i, 0)),  # lane-dense out
        ),
        compiler_params=pltpu.CompilerParams(
            dimension_semantics=("parallel",),
            # default scoped VMEM is ample; do not request 64 MiB.
        ),
    )(x2, c2, w_bf16, bias_folded_f32)

    return out.reshape(B, N, C)


# --------------------------- pure-JAX reference ------------------------------


def ada_layer_norm_ref(x, c, w_f32, bias_f32):
    """Reference with the original (un-folded) bias and two-pass LN stats."""
    mu = jnp.mean(x, axis=-1, keepdims=True)
    var = jnp.mean((x - mu) ** 2, axis=-1, keepdims=True)
    x_norm = (x - mu) / jnp.sqrt(var + 1e-6)

    silu_c = c * jax.nn.sigmoid(c)
    mod = silu_c @ w_f32 + bias_f32[0]
    shift, scale = jnp.split(mod, 2, axis=-1)
    return x_norm * (1.0 + scale) + shift


# --------------------------------- main --------------------------------------


if __name__ == "__main__":
    # Small, but large enough that the tiler picks TM=256 with 4 grid steps
    # (>= 2 per TensorCore on v7x) instead of being launch-dominated.
    B, N, C = 2, 512, 128

    root = jax.random.PRNGKey(0)
    kx, kc, kw, kb = jax.random.split(root, 4)

    # HBM-resident activations in bf16 (kernel upcasts; LN math stays f32).
    x = jax.random.normal(kx, (B, N, C), jnp.float32).astype(jnp.bfloat16)
    c = jax.random.normal(kc, (B, N, C), jnp.float32).astype(jnp.bfloat16)

    # Modulation Linear: weight pre-transposed to (C, 2C); small nonzero init
    # (see module-level note). Reference uses the same bf16-rounded weight
    # upcast to f32, so divergence is only bf16 activation/output rounding.
    w_f32 = 0.02 * jax.random.normal(kw, (C, 2 * C), jnp.float32)
    bias = 0.02 * jax.random.normal(kb, (1, 2 * C), jnp.float32)
    w_bf16, bias_folded = prep_modulation_params(w_f32, bias, C)

    out = ada_layer_norm_pallas(x, c, w_bf16, bias_folded)
    out = jax.block_until_ready(out)

    ref = jax.block_until_ready(
        ada_layer_norm_ref(
            x.astype(jnp.float32), c.astype(jnp.float32),
            w_bf16.astype(jnp.float32), bias,
        )
    )

    assert out.shape == (B, N, C)
    assert out.dtype == jnp.bfloat16
    # bf16 output / MXU-input rounding loosens agreement; LN math is f32.
    err = float(jnp.max(jnp.abs(out.astype(jnp.float32) - ref)))
    assert jnp.allclose(out.astype(jnp.float32), ref, atol=3e-2, rtol=3e-2), err

    print("KERNEL_OK")
</pallas_src>

<mosaic_0001>
module attributes {stable_mosaic.version = 11 : i64} {
  func.func @ada_layer_norm_kernel(%arg0: i32, %arg1: memref<256x128xbf16, #tpu.memory_space<vmem>>, %arg2: memref<256x128xbf16, #tpu.memory_space<vmem>>, %arg3: memref<128x256xbf16, #tpu.memory_space<vmem>>, %arg4: memref<1x256xf32, #tpu.memory_space<vmem>>, %arg5: memref<256x128xbf16, #tpu.memory_space<vmem>>) attributes {dimension_semantics = [#tpu.dimension_semantics<parallel>], iteration_bounds = array<i64: 4>, scalar_prefetch = 0 : i64, scratch_operands = 0 : i64, tpu.core_type = #tpu.core_type<tc>, window_params = [{transform_indices = @transform_0, window_bounds = array<i64: 256, 128>}, {transform_indices = @transform_1, window_bounds = array<i64: 256, 128>}, {pipeline_mode = #tpu.pipeline_mode<synchronous>, transform_indices = @transform_2, window_bounds = array<i64: 128, 256>}, {pipeline_mode = #tpu.pipeline_mode<synchronous>, transform_indices = @transform_3, window_bounds = array<i64: 1, 256>}, {transform_indices = @transform_4, window_bounds = array<i64: 256, 128>}]} {
    %c0 = arith.constant 0 : index
    %c0_0 = arith.constant 0 : index
    %0 = vector.load %arg1[%c0, %c0_0] : memref<256x128xbf16, #tpu.memory_space<vmem>>, vector<256x128xbf16>
    %1 = arith.extf %0 : vector<256x128xbf16> to vector<256x128xf32>
    %c0_1 = arith.constant 0 : index
    %c0_2 = arith.constant 0 : index
    %2 = vector.load %arg2[%c0_1, %c0_2] : memref<256x128xbf16, #tpu.memory_space<vmem>>, vector<256x128xbf16>
    %3 = arith.extf %2 : vector<256x128xbf16> to vector<256x128xf32>
    %cst = arith.constant dense<0.000000e+00> : vector<256xf32>
    %4 = vector.multi_reduction <add>, %1, %cst [1] : vector<256x128xf32> to vector<256xf32>
    %5 = vector.shape_cast %4 : vector<256xf32> to vector<256x1xf32>
    %cst_3 = arith.constant 7.812500e-03 : f32
    %6 = vector.broadcast %cst_3 : f32 to vector<256x1xf32>
    %7 = arith.mulf %5, %6 : vector<256x1xf32>
    %8 = arith.mulf %1, %1 : vector<256x128xf32>
    %cst_4 = arith.constant dense<0.000000e+00> : vector<256xf32>
    %9 = vector.multi_reduction <add>, %8, %cst_4 [1] : vector<256x128xf32> to vector<256xf32>
    %10 = vector.shape_cast %9 : vector<256xf32> to vector<256x1xf32>
    %cst_5 = arith.constant 7.812500e-03 : f32
    %11 = vector.broadcast %cst_5 : f32 to vector<256x1xf32>
    %12 = arith.mulf %10, %11 : vector<256x1xf32>
    %13 = arith.mulf %7, %7 : vector<256x1xf32>
    %14 = arith.subf %12, %13 : vector<256x1xf32>
    %cst_6 = arith.constant 0.000000e+00 : f32
    %15 = vector.broadcast %cst_6 : f32 to vector<256x1xf32>
    %16 = arith.maximumf %14, %15 : vector<256x1xf32>
    %17 = vector.broadcast %7 : vector<256x1xf32> to vector<256x128xf32>
    %18 = arith.subf %1, %17 : vector<256x128xf32>
    %cst_7 = arith.constant 9.99999997E-7 : f32
    %19 = vector.broadcast %cst_7 : f32 to vector<256x1xf32>
    %20 = arith.addf %16, %19 : vector<256x1xf32>
    %21 = math.rsqrt %20 : vector<256x1xf32>
    %22 = vector.broadcast %21 : vector<256x1xf32> to vector<256x128xf32>
    %23 = arith.mulf %18, %22 : vector<256x128xf32>
    %24 = arith.negf %3 : vector<256x128xf32>
    %25 = math.exp %24 : vector<256x128xf32>
    %cst_8 = arith.constant 1.000000e+00 : f32
    %26 = vector.broadcast %cst_8 : f32 to vector<256x128xf32>
    %27 = arith.addf %26, %25 : vector<256x128xf32>
    %28 = arith.divf %26, %27 : vector<256x128xf32>
    %29 = arith.mulf %3, %28 : vector<256x128xf32>
    %30 = arith.truncf %29 : vector<256x128xf32> to vector<256x128xbf16>
    %c0_9 = arith.constant 0 : index
    %c0_10 = arith.constant 0 : index
    %31 = vector.load %arg3[%c0_9, %c0_10] : memref<128x256xbf16, #tpu.memory_space<vmem>>, vector<128x256xbf16>
    %cst_11 = arith.constant dense<0.000000e+00> : vector<256x256xf32>
    %32 = tpu.matmul %30, %31, %cst_11 {dimension_numbers = #tpu.dot_dimension_numbers<[1], [0], [0], [1], [0, 0, 1, 1], [], []>} : vector<256x128xbf16>, vector<128x256xbf16>, vector<256x256xf32> -> vector<256x256xf32>
    %c0_12 = arith.constant 0 : index
    %c0_13 = arith.constant 0 : index
    %33 = vector.load %arg4[%c0_12, %c0_13] : memref<1x256xf32, #tpu.memory_space<vmem>>, vector<1x256xf32>
    %34 = vector.broadcast %33 : vector<1x256xf32> to vector<256x256xf32>
    %35 = arith.addf %32, %34 : vector<256x256xf32>
    %36 = vector.extract_strided_slice %35 {offsets = [0, 0], sizes = [256, 128], strides = [1, 1]} : vector<256x256xf32> to vector<256x128xf32>
    %37 = vector.extract_strided_slice %35 {offsets = [0, 128], sizes = [256, 128], strides = [1, 1]} : vector<256x256xf32> to vector<256x128xf32>
    %38 = arith.mulf %23, %37 : vector<256x128xf32>
    %39 = arith.addf %38, %36 : vector<256x128xf32>
    %40 = arith.truncf %39 : vector<256x128xf32> to vector<256x128xbf16>
    %c0_14 = arith.constant 0 : index
    %c0_15 = arith.constant 0 : index
    %41 = vector.load %arg5[%c0_14, %c0_15] : memref<256x128xbf16, #tpu.memory_space<vmem>>, vector<256x128xbf16>
    tpu.vector_store %arg5[%c0_14, %c0_15], %40 {strides = array<i32>} : memref<256x128xbf16, #tpu.memory_space<vmem>>, vector<256x128xbf16>,
    return
  }
  func.func @transform_0(%arg0: i32) -> (i32, i32) {
    %c0_i32 = arith.constant 0 : i32
    %c0_i32_0 = arith.constant 0 : i32
    return %arg0, %c0_i32 : i32, i32
  }
  func.func @transform_1(%arg0: i32) -> (i32, i32) {
    %c0_i32 = arith.constant 0 : i32
    %c0_i32_0 = arith.constant 0 : i32
    return %arg0, %c0_i32 : i32, i32
  }
  func.func @transform_2(%arg0: i32) -> (i32, i32) {
    %c0_i32 = arith.constant 0 : i32
    %c0_i32_0 = arith.constant 0 : i32
    %c0_i32_1 = arith.constant 0 : i32
    return %c0_i32, %c0_i32_0 : i32, i32
  }
  func.func @transform_3(%arg0: i32) -> (i32, i32) {
    %c0_i32 = arith.constant 0 : i32
    %c0_i32_0 = arith.constant 0 : i32
    %c0_i32_1 = arith.constant 0 : i32
    return %c0_i32, %c0_i32_0 : i32, i32
  }
  func.func @transform_4(%arg0: i32) -> (i32, i32) {
    %c0_i32 = arith.constant 0 : i32
    %c0_i32_0 = arith.constant 0 : i32
    return %arg0, %c0_i32 : i32, i32
  }
}

</mosaic_0001>

<llo_original>
// kernel: tpu_custom_call.1
$region0: #{tpu_custom_call.1}
  #allocation0 [shape = 'u32[]', space=smem, size = 0x4, offset = 0x4, fixed_abs, tag = 'smem constant byte address 0x4 - core index']
  #allocation1 [shape = 'u32[144,128]{1,0:T(1,128)}', space=vmem, size = 0x12000, scoped, tag = 'internal scratch']
  %s0 = inlined_call_operand.hbm [shape: bf16[1024,128], index: 0, kind: input, shape index: {}]
  %s1 = inlined_call_operand.hbm [shape: bf16[1024,128], index: 1, kind: input, shape index: {}]
  %s2 = inlined_call_operand.hbm [shape: bf16[128,256], index: 2, kind: input, shape index: {}]
  %s3 = inlined_call_operand.vmem [shape: f32[1,256], index: 3, kind: input, shape index: {}]
  %s4 = inlined_call_operand.hbm [shape: bf16[1024,128], index: 4, kind: output, shape index: {}]
  %s5 = sld [smem:[#allocation0]]
  $region61: #{tpu_custom_call.1} parent=0
    _
  %s7 = ssub.s32 1, %s5
  %s8 = scalar_select 0, %s7, %s5
  $region1: #{tpu_custom_call.1} parent=0
    #allocation2 [shape = 'u8[131072]{0}', space=vmem, size = 0x20000, scoped, tag = 'input window, operand 0']
    #allocation3 [shape = 's32[2]{0}', space=sflag, size = 0x8, scoped, tag = 'scoped memory for tpu_custom_call.1']
    #allocation4 [shape = 's32[2]{0}', space=sflag, size = 0x8, scoped, tag = 'scoped memory for tpu_custom_call.1']
    #allocation5 [shape = 'u8[131072]{0}', space=vmem, size = 0x20000, scoped, tag = 'input window, operand 1']
    #allocation6 [shape = 's32[2]{0}', space=sflag, size = 0x8, scoped, tag = 'scoped memory for tpu_custom_call.1']
    #allocation7 [shape = 'u8[65536]{0}', space=vmem, size = 0x10000, scoped, tag = 'input window, operand 2, single buffered']
    #allocation8 [shape = 'u8[131072]{0}', space=vmem, size = 0x20000, scoped, tag = 'output window, operand 0']
    %9 = vsyncpa [#allocation3], 0
    %s10 = scalar_lea.sflag [#allocation3], 1
    %11 = vsyncpa %s10, 0
    %12 = vsyncpa [#allocation6], 0
    %s13 = scalar_lea.sflag [#allocation6], 1
    %14 = vsyncpa %s13, 0
    %15 = vsyncpa [#allocation4], 0
    %s16 = scalar_lea.sflag [#allocation4], 1
    %17 = vsyncpa %s16, 0
    loop: start=0, step=1, limit=6
    $region2: #{tpu_custom_call.1} parent=1 // loop_pre_header
      _
    $region3: #{tpu_custom_call.1} parent=1 // loop_header
      %s19 = sphi 0, %s23
      %p20 = scmp.ge.s32.totalorder %s19, 6
      %s29 = sphi 0, %s31
      %s32 = sphi 0, %s29
      %s33 = sphi 0, %s32
      %s49 = sphi 0, %s33
      %s55 = sphi 0, %s57
      %s58 = sphi 0, %s55
      %s59 = sphi 0, %s58
      %s75 = sphi 0, %s59
      %s79 = sphi 0, %s79
      %s81 = sphi 0, %s79
      %s82 = sphi 0, %s81
      %s96 = sphi 0, %s82
      %s100 = sphi 0, %s100
      %s102 = sphi 0, %s100
      %s103 = sphi 0, %s102
      %s117 = sphi 0, %s103
      %s123 = sphi 0, %s125
      %s126 = sphi 0, %s123
      %s127 = sphi 0, %s126
      %s143 = sphi 0, %s127
    $region4: #{tpu_custom_call.1} parent=1 // loop_header_branch
      %22 = sbr.rel (%p20) target = $region8
    $region5: #{tpu_custom_call.1} parent=1 // loop_body
      %s24 = ssub.s32 %s19, 1
      %s25 = ssub.s32 %s19, 2
      %s26 = sadd.s32 %s19, 1
      %s27 = ssub.s32 %s19, %s26
      %p28 = scmp.eq.s32.totalorder %s27, 0
      %s30 = sadd.s32 %s29, 1
      %s31 = scalar_select %p28, %s29, %s30
      %p34 = pneg %p28
      %p35 = scmp.eq.s32.totalorder %s19, 3
      %p36 = por %p34, %p35
      %p37 = scmp.ne.s32.totalorder %s29, %s32
      %p38 = scmp.eq.s32.totalorder %s19, 0
      %p39 = por %p37, %p38
      %p40 = scmp.ne.s32.totalorder %s29, %s32
      %p41 = scmp.eq.s32.totalorder %s24, 3
      %p42 = por %p40, %p41
      %p43 = scmp.ne.s32.totalorder %s32, %s33
      %p44 = scmp.eq.s32.totalorder %s24, 0
      %p45 = por %p43, %p44
      %p46 = scmp.ne.s32.totalorder %s32, %s33
      %p47 = scmp.eq.s32.totalorder %s25, 3
      %p48 = por %p46, %p47
      %p50 = scmp.ne.s32.totalorder %s33, %s49
      %p51 = scmp.eq.s32.totalorder %s25, 0
      %p52 = por %p50, %p51
      %s53 = ssub.s32 %s19, %s26
      %p54 = scmp.eq.s32.totalorder %s53, 0
      %s56 = sadd.s32 %s55, 1
      %s57 = scalar_select %p54, %s55, %s56
      %p60 = pneg %p54
      %p61 = scmp.eq.s32.totalorder %s19, 3
      %p62 = por %p60, %p61
      %p63 = scmp.ne.s32.totalorder %s55, %s58
      %p64 = scmp.eq.s32.totalorder %s19, 0
      %p65 = por %p63, %p64
      %p66 = scmp.ne.s32.totalorder %s55, %s58
      %p67 = scmp.eq.s32.totalorder %s24, 3
      %p68 = por %p66, %p67
      %p69 = scmp.ne.s32.totalorder %s58, %s59
      %p70 = scmp.eq.s32.totalorder %s24, 0
      %p71 = por %p69, %p70
      %p72 = scmp.ne.s32.totalorder %s58, %s59
      %p73 = scmp.eq.s32.totalorder %s25, 3
      %p74 = por %p72, %p73
      %p76 = scmp.ne.s32.totalorder %s59, %s75
      %p77 = scmp.eq.s32.totalorder %s25, 0
      %p78 = por %p76, %p77
      %s80 = sadd.s32 %s79, 1
      %p83 = scmp.eq.s32.totalorder %s19, 3
      %p84 = scmp.ne.s32.totalorder %s79, %s81
      %p85 = scmp.eq.s32.totalorder %s19, 0
      %p86 = por %p84, %p85
      %p87 = scmp.ne.s32.totalorder %s79, %s81
      %p88 = scmp.eq.s32.totalorder %s24, 3
      %p89 = por %p87, %p88
      %p90 = scmp.ne.s32.totalorder %s81, %s82
      %p91 = scmp.eq.s32.totalorder %s24, 0
      %p92 = por %p90, %p91
      %p93 = scmp.ne.s32.totalorder %s81, %s82
      %p94 = scmp.eq.s32.totalorder %s25, 3
      %p95 = por %p93, %p94
      %p97 = scmp.ne.s32.totalorder %s82, %s96
      %p98 = scmp.eq.s32.totalorder %s25, 0
      %p99 = por %p97, %p98
      %s101 = sadd.s32 %s100, 1
      %p104 = scmp.eq.s32.totalorder %s19, 3
      %p105 = scmp.ne.s32.totalorder %s100, %s102
      %p106 = scmp.eq.s32.totalorder %s19, 0
      %p107 = por %p105, %p106
      %p108 = scmp.ne.s32.totalorder %s100, %s102
      %p109 = scmp.eq.s32.totalorder %s24, 3
      %p110 = por %p108, %p109
      %p111 = scmp.ne.s32.totalorder %s102, %s103
      %p112 = scmp.eq.s32.totalorder %s24, 0
      %p113 = por %p111, %p112
      %p114 = scmp.ne.s32.totalorder %s102, %s103
      %p115 = scmp.eq.s32.totalorder %s25, 3
      %p116 = por %p114, %p115
      %p118 = scmp.ne.s32.totalorder %s103, %s117
      %p119 = scmp.eq.s32.totalorder %s25, 0
      %p120 = por %p118, %p119
      %s121 = ssub.s32 %s19, %s26
      %p122 = scmp.eq.s32.totalorder %s121, 0
      %s124 = sadd.s32 %s123, 1
      %s125 = scalar_select %p122, %s123, %s124
      %p128 = pneg %p122
      %p129 = scmp.eq.s32.totalorder %s19, 3
      %p130 = por %p128, %p129
      %p131 = scmp.ne.s32.totalorder %s123, %s126
      %p132 = scmp.eq.s32.totalorder %s19, 0
      %p133 = por %p131, %p132
      %p134 = scmp.ne.s32.totalorder %s123, %s126
      %p135 = scmp.eq.s32.totalorder %s24, 3
      %p136 = por %p134, %p135
      %p137 = scmp.ne.s32.totalorder %s126, %s127
      %p138 = scmp.eq.s32.totalorder %s24, 0
      %p139 = por %p137, %p138
      %p140 = scmp.ne.s32.totalorder %s126, %s127
      %p141 = scmp.eq.s32.totalorder %s25, 3
      %p142 = por %p140, %p141
      %p144 = scmp.ne.s32.totalorder %s127, %s143
      %p145 = scmp.eq.s32.totalorder %s25, 0
      %p146 = por %p144, %p145
      %p147 = scmp.le.s32.totalorder 1, %s19
      %p148 = scmp.lt.s32.totalorder %s19, 5
      %p149 = pnand %p147, %p148
      %p150 = pneg %p149
      // Predicated region
      $region9: #{tpu_custom_call.1} parent=5 // pred_check
        _
      $region10: #{tpu_custom_call.1} parent=5 // pred_check_branch
        %152 = sbr.rel (%p149) target = $region12
      $region11: #{tpu_custom_call.1} parent=5 // pred_region
        %s153 = ssub.s32 %s19, 1
        // Predicated region
        $region13: #{tpu_custom_call.1} parent=11 // pred_check
          %p154 = pneg %p92
        $region14: #{tpu_custom_call.1} parent=11 // pred_check_branch
          %156 = sbr.rel (%p154) target = $region16
        $region15: #{tpu_custom_call.1} parent=11 // pred_region
          %s158 = ssub.s32 2048, 2048
          %159 = vsyncadd [#allocation6], %s158
          %s160 = sshll.u32 [#allocation7], 4
          %s161 = int_to_ptr.vmem [resolvable:$true] %s160
          %166 = dma.hbm_to_vmem [thread:$0]  %s2, 2048, %s161, [#allocation6], 128, 128, 8
        $region16: #{tpu_custom_call.1} parent=11 // pred_fallthru
          _
        // Predicated region
        $region17: #{tpu_custom_call.1} parent=11 // pred_check
          %p167 = pneg %p113
        $region18: #{tpu_custom_call.1} parent=11 // pred_check_branch
          %169 = sbr.rel (%p167) target = $region20
        $region19: #{tpu_custom_call.1} parent=11 // pred_region
          _
        $region20: #{tpu_custom_call.1} parent=11 // pred_fallthru
          _
      $region12: #{tpu_custom_call.1} parent=5 // pred_fallthru
        _
      %p170 = scmp.lt.s32.totalorder %s19, 4
      // Predicated region
      $region21: #{tpu_custom_call.1} parent=5 // pred_check
        %p171 = pneg %p170
      $region22: #{tpu_custom_call.1} parent=5 // pred_check_branch
        %173 = sbr.rel (%p171) target = $region24
      $region23: #{tpu_custom_call.1} parent=5 // pred_region
        // Predicated region
        $region25: #{tpu_custom_call.1} parent=23 // pred_check
          %p174 = pneg %p39
        $region26: #{tpu_custom_call.1} parent=23 // pred_check_branch
          %176 = sbr.rel (%p174) target = $region28
        $region27: #{tpu_custom_call.1} parent=23 // pred_region
          %s177 = sand.u32 %s29, 1
          %s178 = scalar_lea.sflag [#allocation3], %s177
          %s179 = sand.u32 %s29, 1
          %s180 = smul.addr %s179, 128
          %s181 = scalar_lea.vmem [#allocation2], %s180
          %s182 = smul.u32 32, %s19
          %s184 = ssub.s32 2048, 2048
          %185 = vsyncadd %s178, %s184
          %s186 = smul.addr %s182, 64
          %s187 = scalar_lea.hbm %s0, %s186
          %s188 = sshll.u32 %s181, 4
          %s189 = int_to_ptr.vmem [resolvable:$true] %s188
          %194 = dma.hbm_to_vmem [thread:$0]  %s187, 2048, %s189, %s178, 64, 64, 4
        $region28: #{tpu_custom_call.1} parent=23 // pred_fallthru
          _
        // Predicated region
        $region29: #{tpu_custom_call.1} parent=23 // pred_check
          %p195 = pneg %p65
        $region30: #{tpu_custom_call.1} parent=23 // pred_check_branch
          %197 = sbr.rel (%p195) target = $region32
        $region31: #{tpu_custom_call.1} parent=23 // pred_region
          %s198 = sand.u32 %s19, 1
          %s199 = scalar_lea.sflag [#allocation6], %s198
          %s200 = sand.u32 %s55, 1
          %s201 = smul.addr %s200, 128
          %s202 = scalar_lea.vmem [#allocation5], %s201
          %s203 = smul.u32 32, %s19
          %s205 = ssub.s32 2048, 2048
          %206 = vsyncadd %s199, %s205
          %s207 = smul.addr %s203, 64
          %s208 = scalar_lea.hbm %s1, %s207
          %s209 = sshll.u32 %s202, 4
          %s210 = int_to_ptr.vmem [resolvable:$true] %s209
          %215 = dma.hbm_to_vmem [thread:$0]  %s208, 2048, %s210, %s199, 64, 64, 4
        $region32: #{tpu_custom_call.1} parent=23 // pred_fallthru
          _
      $region24: #{tpu_custom_call.1} parent=5 // pred_fallthru
        _
      %p216 = scmp.le.s32.totalorder 1, %s19
      %p217 = scmp.lt.s32.totalorder %s19, 5
      %p218 = pnand %p216, %p217
      %p219 = pneg %p218
      // Predicated region
      $region33: #{tpu_custom_call.1} parent=5 // pred_check
        _
      $region34: #{tpu_custom_call.1} parent=5 // pred_check_branch
        %221 = sbr.rel (%p218) target = $region36
      $region35: #{tpu_custom_call.1} parent=5 // pred_region
        %s222 = ssub.s32 %s19, 1
        %s223 = sand.u32 %s32, 1
        %s224 = scalar_lea.sflag [#allocation3], %s223
        %s225 = sand.u32 %s32, 1
        %s226 = smul.addr %s225, 128
        %s227 = scalar_lea.vmem [#allocation2], %s226
        // Predicated region
        $region37: #{tpu_custom_call.1} parent=35 // pred_check
          %p228 = pneg %p45
        $region38: #{tpu_custom_call.1} parent=35 // pred_check_branch
          %230 = sbr.rel (%p228) target = $region40
        $region39: #{tpu_custom_call.1} parent=35 // pred_region
          %231 = dma.done %s224, 2048
        $region40: #{tpu_custom_call.1} parent=35 // pred_fallthru
          _
        %s232 = sand.u32 %s24, 1
        %s233 = scalar_lea.sflag [#allocation6], %s232
        %s234 = sand.u32 %s58, 1
        %s235 = smul.addr %s234, 128
        %s236 = scalar_lea.vmem [#allocation5], %s235
        // Predicated region
        $region41: #{tpu_custom_call.1} parent=35 // pred_check
          %p237 = pneg %p71
        $region42: #{tpu_custom_call.1} parent=35 // pred_check_branch
          %239 = sbr.rel (%p237) target = $region44
        $region43: #{tpu_custom_call.1} parent=35 // pred_region
          %240 = dma.done %s233, 2048
        $region44: #{tpu_custom_call.1} parent=35 // pred_fallthru
          _
        // Predicated region
        $region45: #{tpu_custom_call.1} parent=35 // pred_check
          %p241 = pneg %p92
        $region46: #{tpu_custom_call.1} parent=35 // pred_check_branch
          %243 = sbr.rel (%p241) target = $region48
        $region47: #{tpu_custom_call.1} parent=35 // pred_region
          %244 = dma.done [#allocation6], 2048
        $region48: #{tpu_custom_call.1} parent=35 // pred_fallthru
          _
        %s245 = sand.u32 %s32, 1
        %s246 = scalar_lea.sflag [#allocation3], %s245
        %s247 = sand.u32 %s32, 1
        %s248 = smul.addr %s247, 128
        %s249 = scalar_lea.vmem [#allocation2], %s248
        %p250 = pneg %p45
        %p251 = pneg %p42
        %s252 = sand.u32 %s24, 1
        %s253 = scalar_lea.sflag [#allocation6], %s252
        %s254 = sand.u32 %s58, 1
        %s255 = smul.addr %s254, 128
        %s256 = scalar_lea.vmem [#allocation5], %s255
        %p257 = pneg %p71
        %p258 = pneg %p68
        %p259 = pneg %p92
        %p260 = pneg %p89
        %p261 = pneg %p113
        %p262 = pneg %p110
        %p263 = pneg %p139
        %p264 = pneg %p136
        %s265 = sand.u32 %s126, 1
        %s266 = scalar_lea.sflag [#allocation4], %s265
        %s267 = sand.u32 %s126, 1
        %s268 = smul.addr %s267, 128
        %s269 = scalar_lea.vmem [#allocation8], %s268
        %s270 = smul.u32 32, %s24
        %s271 = smul.u32 32, %s24
        %s272 = smul.u32 32, %s24
        %v274 = vld [vmem:[%s227] sm:$0xf]
        %v275 = vld [vmem:[%s227 + $0x4] sm:$0xf]
        %v276 = vld [vmem:[%s227 + $0x8] sm:$0xf]
        %v277 = vld [vmem:[%s227 + $0xc] sm:$0xf]
        %v278 = vld [vmem:[%s227 + $0x10] sm:$0xf]
        %v279 = vld [vmem:[%s227 + $0x14] sm:$0xf]
        %v280 = vld [vmem:[%s227 + $0x18] sm:$0xf]
        %v281 = vld [vmem:[%s227 + $0x1c] sm:$0xf]
        %v282 = vld [vmem:[%s227 + $0x20] sm:$0xf]
        %v283 = vld [vmem:[%s227 + $0x24] sm:$0xf]
        %v284 = vld [vmem:[%s227 + $0x28] sm:$0xf]
        %v285 = vld [vmem:[%s227 + $0x2c] sm:$0xf]
        %v286 = vld [vmem:[%s227 + $0x30] sm:$0xf]
        %v287 = vld [vmem:[%s227 + $0x34] sm:$0xf]
        %v288 = vld [vmem:[%s227 + $0x38] sm:$0xf]
        %v289 = vld [vmem:[%s227 + $0x3c] sm:$0xf]
        %v290 = vld [vmem:[%s227 + $0x40] sm:$0xf]
        %v291 = vld [vmem:[%s227 + $0x44] sm:$0xf]
        %v292 = vld [vmem:[%s227 + $0x48] sm:$0xf]
        %v293 = vld [vmem:[%s227 + $0x4c] sm:$0xf]
        %v294 = vld [vmem:[%s227 + $0x50] sm:$0xf]
        %v295 = vld [vmem:[%s227 + $0x54] sm:$0xf]
        %v296 = vld [vmem:[%s227 + $0x58] sm:$0xf]
        %v297 = vld [vmem:[%s227 + $0x5c] sm:$0xf]
        %v298 = vld [vmem:[%s227 + $0x60] sm:$0xf]
        %v299 = vld [vmem:[%s227 + $0x64] sm:$0xf]
        %v300 = vld [vmem:[%s227 + $0x68] sm:$0xf]
        %v301 = vld [vmem:[%s227 + $0x6c] sm:$0xf]
        %v302 = vld [vmem:[%s227 + $0x70] sm:$0xf]
        %v303 = vld [vmem:[%s227 + $0x74] sm:$0xf]
        %v304 = vld [vmem:[%s227 + $0x78] sm:$0xf]
        %v305 = vld [vmem:[%s227 + $0x7c] sm:$0xf]
        %v306 = vunpack.c.l.bf16 %v274
        %v307 = vunpack.c.l.bf16 %v275
        %v308 = vunpack.c.l.bf16 %v276
        %v309 = vunpack.c.l.bf16 %v277
        %v310 = vunpack.c.l.bf16 %v278
        %v311 = vunpack.c.l.bf16 %v279
        %v312 = vunpack.c.l.bf16 %v280
        %v313 = vunpack.c.l.bf16 %v281
        %v314 = vunpack.c.l.bf16 %v282
        %v315 = vunpack.c.l.bf16 %v283
        %v316 = vunpack.c.l.bf16 %v284
        %v317 = vunpack.c.l.bf16 %v285
        %v318 = vunpack.c.l.bf16 %v286
        %v319 = vunpack.c.l.bf16 %v287
        %v320 = vunpack.c.l.bf16 %v288
        %v321 = vunpack.c.l.bf16 %v289
        %v322 = vunpack.c.l.bf16 %v290
        %v323 = vunpack.c.l.bf16 %v291
        %v324 = vunpack.c.l.bf16 %v292
        %v325 = vunpack.c.l.bf16 %v293
        %v326 = vunpack.c.l.bf16 %v294
        %v327 = vunpack.c.l.bf16 %v295
        %v328 = vunpack.c.l.bf16 %v296
        %v329 = vunpack.c.l.bf16 %v297
        %v330 = vunpack.c.l.bf16 %v298
        %v331 = vunpack.c.l.bf16 %v299
        %v332 = vunpack.c.l.bf16 %v300
        %v333 = vunpack.c.l.bf16 %v301
        %v334 = vunpack.c.l.bf16 %v302
        %v335 = vunpack.c.l.bf16 %v303
        %v336 = vunpack.c.l.bf16 %v304
        %v337 = vunpack.c.l.bf16 %v305
        %v338 = vld [vmem:[%s236] sm:$0xf]
        %v339 = vld [vmem:[%s236 + $0x4] sm:$0xf]
        %v340 = vld [vmem:[%s236 + $0x8] sm:$0xf]
        %v341 = vld [vmem:[%s236 + $0xc] sm:$0xf]
        %v342 = vld [vmem:[%s236 + $0x10] sm:$0xf]
        %v343 = vld [vmem:[%s236 + $0x14] sm:$0xf]
        %v344 = vld [vmem:[%s236 + $0x18] sm:$0xf]
        %v345 = vld [vmem:[%s236 + $0x1c] sm:$0xf]
        %v346 = vld [vmem:[%s236 + $0x20] sm:$0xf]
        %v347 = vld [vmem:[%s236 + $0x24] sm:$0xf]
        %v348 = vld [vmem:[%s236 + $0x28] sm:$0xf]
        %v349 = vld [vmem:[%s236 + $0x2c] sm:$0xf]
        %v350 = vld [vmem:[%s236 + $0x30] sm:$0xf]
        %v351 = vld [vmem:[%s236 + $0x34] sm:$0xf]
        %v352 = vld [vmem:[%s236 + $0x38] sm:$0xf]
        %v353 = vld [vmem:[%s236 + $0x3c] sm:$0xf]
        %v354 = vld [vmem:[%s236 + $0x40] sm:$0xf]
        %v355 = vld [vmem:[%s236 + $0x44] sm:$0xf]
        %v356 = vld [vmem:[%s236 + $0x48] sm:$0xf]
        %v357 = vld [vmem:[%s236 + $0x4c] sm:$0xf]
        %v358 = vld [vmem:[%s236 + $0x50] sm:$0xf]
        %v359 = vld [vmem:[%s236 + $0x54] sm:$0xf]
        %v360 = vld [vmem:[%s236 + $0x58] sm:$0xf]
        %v361 = vld [vmem:[%s236 + $0x5c] sm:$0xf]
        %v362 = vld [vmem:[%s236 + $0x60] sm:$0xf]
        %v363 = vld [vmem:[%s236 + $0x64] sm:$0xf]
        %v364 = vld [vmem:[%s236 + $0x68] sm:$0xf]
        %v365 = vld [vmem:[%s236 + $0x6c] sm:$0xf]
        %v366 = vld [vmem:[%s236 + $0x70] sm:$0xf]
        %v367 = vld [vmem:[%s236 + $0x74] sm:$0xf]
        %v368 = vld [vmem:[%s236 + $0x78] sm:$0xf]
        %v369 = vld [vmem:[%s236 + $0x7c] sm:$0xf]
        %v370 = vunpack.c.l.bf16 %v338
        %v371 = vunpack.c.l.bf16 %v339
        %v372 = vunpack.c.l.bf16 %v340
        %v373 = vunpack.c.l.bf16 %v341
        %v374 = vunpack.c.l.bf16 %v342
        %v375 = vunpack.c.l.bf16 %v343
        %v376 = vunpack.c.l.bf16 %v344
        %v377 = vunpack.c.l.bf16 %v345
        %v378 = vunpack.c.l.bf16 %v346
        %v379 = vunpack.c.l.bf16 %v347
        %v380 = vunpack.c.l.bf16 %v348
        %v381 = vunpack.c.l.bf16 %v349
        %v382 = vunpack.c.l.bf16 %v350
        %v383 = vunpack.c.l.bf16 %v351
        %v384 = vunpack.c.l.bf16 %v352
        %v385 = vunpack.c.l.bf16 %v353
        %v386 = vunpack.c.l.bf16 %v354
        %v387 = vunpack.c.l.bf16 %v355
        %v388 = vunpack.c.l.bf16 %v356
        %v389 = vunpack.c.l.bf16 %v357
        %v390 = vunpack.c.l.bf16 %v358
        %v391 = vunpack.c.l.bf16 %v359
        %v392 = vunpack.c.l.bf16 %v360
        %v393 = vunpack.c.l.bf16 %v361
        %v394 = vunpack.c.l.bf16 %v362
        %v395 = vunpack.c.l.bf16 %v363
        %v396 = vunpack.c.l.bf16 %v364
        %v397 = vunpack.c.l.bf16 %v365
        %v398 = vunpack.c.l.bf16 %v366
        %v399 = vunpack.c.l.bf16 %v367
        %v400 = vunpack.c.l.bf16 %v368
        %v401 = vunpack.c.l.bf16 %v369
        %402 = vadd.xlane.f32.xlu0 %v306
        %v403 = vpop.xlane.xlu0 %402
        %404 = vadd.xlane.f32.xlu0 %v307
        %v405 = vpop.xlane.xlu0 %404
        %406 = vadd.xlane.f32.xlu0 %v308
        %v407 = vpop.xlane.xlu0 %406
        %408 = vadd.xlane.f32.xlu0 %v309
        %v409 = vpop.xlane.xlu0 %408
        %410 = vadd.xlane.f32.xlu0 %v310
        %v411 = vpop.xlane.xlu0 %410
        %412 = vadd.xlane.f32.xlu0 %v311
        %v413 = vpop.xlane.xlu0 %412
        %414 = vadd.xlane.f32.xlu0 %v312
        %v415 = vpop.xlane.xlu0 %414
        %416 = vadd.xlane.f32.xlu0 %v313
        %v417 = vpop.xlane.xlu0 %416
        %418 = vadd.xlane.f32.xlu0 %v314
        %v419 = vpop.xlane.xlu0 %418
        %420 = vadd.xlane.f32.xlu0 %v315
        %v421 = vpop.xlane.xlu0 %420
        %422 = vadd.xlane.f32.xlu0 %v316
        %v423 = vpop.xlane.xlu0 %422
        %424 = vadd.xlane.f32.xlu0 %v317
        %v425 = vpop.xlane.xlu0 %424
        %426 = vadd.xlane.f32.xlu0 %v318
        %v427 = vpop.xlane.xlu0 %426
        %428 = vadd.xlane.f32.xlu0 %v319
        %v429 = vpop.xlane.xlu0 %428
        %430 = vadd.xlane.f32.xlu0 %v320
        %v431 = vpop.xlane.xlu0 %430
        %432 = vadd.xlane.f32.xlu0 %v321
        %v433 = vpop.xlane.xlu0 %432
        %434 = vadd.xlane.f32.xlu0 %v322
        %v435 = vpop.xlane.xlu0 %434
        %436 = vadd.xlane.f32.xlu0 %v323
        %v437 = vpop.xlane.xlu0 %436
        %438 = vadd.xlane.f32.xlu0 %v324
        %v439 = vpop.xlane.xlu0 %438
        %440 = vadd.xlane.f32.xlu0 %v325
        %v441 = vpop.xlane.xlu0 %440
        %442 = vadd.xlane.f32.xlu0 %v326
        %v443 = vpop.xlane.xlu0 %442
        %444 = vadd.xlane.f32.xlu0 %v327
        %v445 = vpop.xlane.xlu0 %444
        %446 = vadd.xlane.f32.xlu0 %v328
        %v447 = vpop.xlane.xlu0 %446
        %448 = vadd.xlane.f32.xlu0 %v329
        %v449 = vpop.xlane.xlu0 %448
        %450 = vadd.xlane.f32.xlu0 %v330
        %v451 = vpop.xlane.xlu0 %450
        %452 = vadd.xlane.f32.xlu0 %v331
        %v453 = vpop.xlane.xlu0 %452
        %454 = vadd.xlane.f32.xlu0 %v332
        %v455 = vpop.xlane.xlu0 %454
        %456 = vadd.xlane.f32.xlu0 %v333
        %v457 = vpop.xlane.xlu0 %456
        %458 = vadd.xlane.f32.xlu0 %v334
        %v459 = vpop.xlane.xlu0 %458
        %460 = vadd.xlane.f32.xlu0 %v335
        %v461 = vpop.xlane.xlu0 %460
        %462 = vadd.xlane.f32.xlu0 %v336
        %v463 = vpop.xlane.xlu0 %462
        %464 = vadd.xlane.f32.xlu0 %v337
        %v465 = vpop.xlane.xlu0 %464
        %v466 = vmul.f32 %v403, 0.0078125
        %v467 = vmul.f32 %v405, 0.0078125
        %v468 = vmul.f32 %v407, 0.0078125
        %v469 = vmul.f32 %v409, 0.0078125
        %v470 = vmul.f32 %v411, 0.0078125
        %v471 = vmul.f32 %v413, 0.0078125
        %v472 = vmul.f32 %v415, 0.0078125
        %v473 = vmul.f32 %v417, 0.0078125
        %v474 = vmul.f32 %v419, 0.0078125
        %v475 = vmul.f32 %v421, 0.0078125
        %v476 = vmul.f32 %v423, 0.0078125
        %v477 = vmul.f32 %v425, 0.0078125
        %v478 = vmul.f32 %v427, 0.0078125
        %v479 = vmul.f32 %v429, 0.0078125
        %v480 = vmul.f32 %v431, 0.0078125
        %v481 = vmul.f32 %v433, 0.0078125
        %v482 = vmul.f32 %v435, 0.0078125
        %v483 = vmul.f32 %v437, 0.0078125
        %v484 = vmul.f32 %v439, 0.0078125
        %v485 = vmul.f32 %v441, 0.0078125
        %v486 = vmul.f32 %v443, 0.0078125
        %v487 = vmul.f32 %v445, 0.0078125
        %v488 = vmul.f32 %v447, 0.0078125
        %v489 = vmul.f32 %v449, 0.0078125
        %v490 = vmul.f32 %v451, 0.0078125
        %v491 = vmul.f32 %v453, 0.0078125
        %v492 = vmul.f32 %v455, 0.0078125
        %v493 = vmul.f32 %v457, 0.0078125
        %v494 = vmul.f32 %v459, 0.0078125
        %v495 = vmul.f32 %v461, 0.0078125
        %v496 = vmul.f32 %v463, 0.0078125
        %v497 = vmul.f32 %v465, 0.0078125
        %v498 = vmul.f32 %v306, %v306
        %v499 = vmul.f32 %v307, %v307
        %v500 = vmul.f32 %v308, %v308
        %v501 = vmul.f32 %v309, %v309
        %v502 = vmul.f32 %v310, %v310
        %v503 = vmul.f32 %v311, %v311
        %v504 = vmul.f32 %v312, %v312
        %v505 = vmul.f32 %v313, %v313
        %v506 = vmul.f32 %v314, %v314
        %v507 = vmul.f32 %v315, %v315
        %v508 = vmul.f32 %v316, %v316
        %v509 = vmul.f32 %v317, %v317
        %v510 = vmul.f32 %v318, %v318
        %v511 = vmul.f32 %v319, %v319
        %v512 = vmul.f32 %v320, %v320
        %v513 = vmul.f32 %v321, %v321
        %v514 = vmul.f32 %v322, %v322
        %v515 = vmul.f32 %v323, %v323
        %v516 = vmul.f32 %v324, %v324
        %v517 = vmul.f32 %v325, %v325
        %v518 = vmul.f32 %v326, %v326
        %v519 = vmul.f32 %v327, %v327
        %v520 = vmul.f32 %v328, %v328
        %v521 = vmul.f32 %v329, %v329
        %v522 = vmul.f32 %v330, %v330
        %v523 = vmul.f32 %v331, %v331
        %v524 = vmul.f32 %v332, %v332
        %v525 = vmul.f32 %v333, %v333
        %v526 = vmul.f32 %v334, %v334
        %v527 = vmul.f32 %v335, %v335
        %v528 = vmul.f32 %v336, %v336
        %v529 = vmul.f32 %v337, %v337
        %530 = vadd.xlane.f32.xlu0 %v498
        %v531 = vpop.xlane.xlu0 %530
        %532 = vadd.xlane.f32.xlu0 %v499
        %v533 = vpop.xlane.xlu0 %532
        %534 = vadd.xlane.f32.xlu0 %v500
        %v535 = vpop.xlane.xlu0 %534
        %536 = vadd.xlane.f32.xlu0 %v501
        %v537 = vpop.xlane.xlu0 %536
        %538 = vadd.xlane.f32.xlu0 %v502
        %v539 = vpop.xlane.xlu0 %538
        %540 = vadd.xlane.f32.xlu0 %v503
        %v541 = vpop.xlane.xlu0 %540
        %542 = vadd.xlane.f32.xlu0 %v504
        %v543 = vpop.xlane.xlu0 %542
        %544 = vadd.xlane.f32.xlu0 %v505
        %v545 = vpop.xlane.xlu0 %544
        %546 = vadd.xlane.f32.xlu0 %v506
        %v547 = vpop.xlane.xlu0 %546
        %548 = vadd.xlane.f32.xlu0 %v507
        %v549 = vpop.xlane.xlu0 %548
        %550 = vadd.xlane.f32.xlu0 %v508
        %v551 = vpop.xlane.xlu0 %550
        %552 = vadd.xlane.f32.xlu0 %v509
        %v553 = vpop.xlane.xlu0 %552
        %554 = vadd.xlane.f32.xlu0 %v510
        %v555 = vpop.xlane.xlu0 %554
        %556 = vadd.xlane.f32.xlu0 %v511
        %v557 = vpop.xlane.xlu0 %556
        %558 = vadd.xlane.f32.xlu0 %v512
        %v559 = vpop.xlane.xlu0 %558
        %560 = vadd.xlane.f32.xlu0 %v513
        %v561 = vpop.xlane.xlu0 %560
        %562 = vadd.xlane.f32.xlu0 %v514
        %v563 = vpop.xlane.xlu0 %562
        %564 = vadd.xlane.f32.xlu0 %v515
        %v565 = vpop.xlane.xlu0 %564
        %566 = vadd.xlane.f32.xlu0 %v516
        %v567 = vpop.xlane.xlu0 %566
        %568 = vadd.xlane.f32.xlu0 %v517
        %v569 = vpop.xlane.xlu0 %568
        %570 = vadd.xlane.f32.xlu0 %v518
        %v571 = vpop.xlane.xlu0 %570
        %572 = vadd.xlane.f32.xlu0 %v519
        %v573 = vpop.xlane.xlu0 %572
        %574 = vadd.xlane.f32.xlu0 %v520
        %v575 = vpop.xlane.xlu0 %574
        %576 = vadd.xlane.f32.xlu0 %v521
        %v577 = vpop.xlane.xlu0 %576
        %578 = vadd.xlane.f32.xlu0 %v522
        %v579 = vpop.xlane.xlu0 %578
        %580 = vadd.xlane.f32.xlu0 %v523
        %v581 = vpop.xlane.xlu0 %580
        %582 = vadd.xlane.f32.xlu0 %v524
        %v583 = vpop.xlane.xlu0 %582
        %584 = vadd.xlane.f32.xlu0 %v525
        %v585 = vpop.xlane.xlu0 %584
        %586 = vadd.xlane.f32.xlu0 %v526
        %v587 = vpop.xlane.xlu0 %586
        %588 = vadd.xlane.f32.xlu0 %v527
        %v589 = vpop.xlane.xlu0 %588
        %590 = vadd.xlane.f32.xlu0 %v528
        %v591 = vpop.xlane.xlu0 %590
        %592 = vadd.xlane.f32.xlu0 %v529
        %v593 = vpop.xlane.xlu0 %592
        %v594 = vmul.f32 %v531, 0.0078125
        %v595 = vmul.f32 %v533, 0.0078125
        %v596 = vmul.f32 %v535, 0.0078125
        %v597 = vmul.f32 %v537, 0.0078125
        %v598 = vmul.f32 %v539, 0.0078125
        %v599 = vmul.f32 %v541, 0.0078125
        %v600 = vmul.f32 %v543, 0.0078125
        %v601 = vmul.f32 %v545, 0.0078125
        %v602 = vmul.f32 %v547, 0.0078125
        %v603 = vmul.f32 %v549, 0.0078125
        %v604 = vmul.f32 %v551, 0.0078125
        %v605 = vmul.f32 %v553, 0.0078125
        %v606 = vmul.f32 %v555, 0.0078125
        %v607 = vmul.f32 %v557, 0.0078125
        %v608 = vmul.f32 %v559, 0.0078125
        %v609 = vmul.f32 %v561, 0.0078125
        %v610 = vmul.f32 %v563, 0.0078125
        %v611 = vmul.f32 %v565, 0.0078125
        %v612 = vmul.f32 %v567, 0.0078125
        %v613 = vmul.f32 %v569, 0.0078125
        %v614 = vmul.f32 %v571, 0.0078125
        %v615 = vmul.f32 %v573, 0.0078125
        %v616 = vmul.f32 %v575, 0.0078125
        %v617 = vmul.f32 %v577, 0.0078125
        %v618 = vmul.f32 %v579, 0.0078125
        %v619 = vmul.f32 %v581, 0.0078125
        %v620 = vmul.f32 %v583, 0.0078125
        %v621 = vmul.f32 %v585, 0.0078125
        %v622 = vmul.f32 %v587, 0.0078125
        %v623 = vmul.f32 %v589, 0.0078125
        %v624 = vmul.f32 %v591, 0.0078125
        %v625 = vmul.f32 %v593, 0.0078125
        %v626 = vmul.f32 %v466, %v466
        %v627 = vmul.f32 %v467, %v467
        %v628 = vmul.f32 %v468, %v468
        %v629 = vmul.f32 %v469, %v469
        %v630 = vmul.f32 %v470, %v470
        %v631 = vmul.f32 %v471, %v471
        %v632 = vmul.f32 %v472, %v472
        %v633 = vmul.f32 %v473, %v473
        %v634 = vmul.f32 %v474, %v474
        %v635 = vmul.f32 %v475, %v475
        %v636 = vmul.f32 %v476, %v476
        %v637 = vmul.f32 %v477, %v477
        %v638 = vmul.f32 %v478, %v478
        %v639 = vmul.f32 %v479, %v479
        %v640 = vmul.f32 %v480, %v480
        %v641 = vmul.f32 %v481, %v481
        %v642 = vmul.f32 %v482, %v482
        %v643 = vmul.f32 %v483, %v483
        %v644 = vmul.f32 %v484, %v484
        %v645 = vmul.f32 %v485, %v485
        %v646 = vmul.f32 %v486, %v486
        %v647 = vmul.f32 %v487, %v487
        %v648 = vmul.f32 %v488, %v488
        %v649 = vmul.f32 %v489, %v489
        %v650 = vmul.f32 %v490, %v490
        %v651 = vmul.f32 %v491, %v491
        %v652 = vmul.f32 %v492, %v492
        %v653 = vmul.f32 %v493, %v493
        %v654 = vmul.f32 %v494, %v494
        %v655 = vmul.f32 %v495, %v495
        %v656 = vmul.f32 %v496, %v496
        %v657 = vmul.f32 %v497, %v497
        %v658 = vsub.f32 %v594, %v626
        %v659 = vsub.f32 %v595, %v627
        %v660 = vsub.f32 %v596, %v628
        %v661 = vsub.f32 %v597, %v629
        %v662 = vsub.f32 %v598, %v630
        %v663 = vsub.f32 %v599, %v631
        %v664 = vsub.f32 %v600, %v632
        %v665 = vsub.f32 %v601, %v633
        %v666 = vsub.f32 %v602, %v634
        %v667 = vsub.f32 %v603, %v635
        %v668 = vsub.f32 %v604, %v636
        %v669 = vsub.f32 %v605, %v637
        %v670 = vsub.f32 %v606, %v638
        %v671 = vsub.f32 %v607, %v639
        %v672 = vsub.f32 %v608, %v640
        %v673 = vsub.f32 %v609, %v641
        %v674 = vsub.f32 %v610, %v642
        %v675 = vsub.f32 %v611, %v643
        %v676 = vsub.f32 %v612, %v644
        %v677 = vsub.f32 %v613, %v645
        %v678 = vsub.f32 %v614, %v646
        %v679 = vsub.f32 %v615, %v647
        %v680 = vsub.f32 %v616, %v648
        %v681 = vsub.f32 %v617, %v649
        %v682 = vsub.f32 %v618, %v650
        %v683 = vsub.f32 %v619, %v651
        %v684 = vsub.f32 %v620, %v652
        %v685 = vsub.f32 %v621, %v653
        %v686 = vsub.f32 %v622, %v654
        %v687 = vsub.f32 %v623, %v655
        %v688 = vsub.f32 %v624, %v656
        %v689 = vsub.f32 %v625, %v657
        %v690 = vmax.f32 %v658, 0.0
        %v691 = vmax.f32 %v659, 0.0
        %v692 = vmax.f32 %v660, 0.0
        %v693 = vmax.f32 %v661, 0.0
        %v694 = vmax.f32 %v662, 0.0
        %v695 = vmax.f32 %v663, 0.0
        %v696 = vmax.f32 %v664, 0.0
        %v697 = vmax.f32 %v665, 0.0
        %v698 = vmax.f32 %v666, 0.0
        %v699 = vmax.f32 %v667, 0.0
        %v700 = vmax.f32 %v668, 0.0
        %v701 = vmax.f32 %v669, 0.0
        %v702 = vmax.f32 %v670, 0.0
        %v703 = vmax.f32 %v671, 0.0
        %v704 = vmax.f32 %v672, 0.0
        %v705 = vmax.f32 %v673, 0.0
        %v706 = vmax.f32 %v674, 0.0
        %v707 = vmax.f32 %v675, 0.0
        %v708 = vmax.f32 %v676, 0.0
        %v709 = vmax.f32 %v677, 0.0
        %v710 = vmax.f32 %v678, 0.0
        %v711 = vmax.f32 %v679, 0.0
        %v712 = vmax.f32 %v680, 0.0
        %v713 = vmax.f32 %v681, 0.0
        %v714 = vmax.f32 %v682, 0.0
        %v715 = vmax.f32 %v683, 0.0
        %v716 = vmax.f32 %v684, 0.0
        %v717 = vmax.f32 %v685, 0.0
        %v718 = vmax.f32 %v686, 0.0
        %v719 = vmax.f32 %v687, 0.0
        %v720 = vmax.f32 %v688, 0.0
        %v721 = vmax.f32 %v689, 0.0
        %v722 = vsub.f32 %v306, %v466
        %v723 = vsub.f32 %v307, %v467
        %v724 = vsub.f32 %v308, %v468
        %v725 = vsub.f32 %v309, %v469
        %v726 = vsub.f32 %v310, %v470
        %v727 = vsub.f32 %v311, %v471
        %v728 = vsub.f32 %v312, %v472
        %v729 = vsub.f32 %v313, %v473
        %v730 = vsub.f32 %v314, %v474
        %v731 = vsub.f32 %v315, %v475
        %v732 = vsub.f32 %v316, %v476
        %v733 = vsub.f32 %v317, %v477
        %v734 = vsub.f32 %v318, %v478
        %v735 = vsub.f32 %v319, %v479
        %v736 = vsub.f32 %v320, %v480
        %v737 = vsub.f32 %v321, %v481
        %v738 = vsub.f32 %v322, %v482
        %v739 = vsub.f32 %v323, %v483
        %v740 = vsub.f32 %v324, %v484
        %v741 = vsub.f32 %v325, %v485
        %v742 = vsub.f32 %v326, %v486
        %v743 = vsub.f32 %v327, %v487
        %v744 = vsub.f32 %v328, %v488
        %v745 = vsub.f32 %v329, %v489
        %v746 = vsub.f32 %v330, %v490
        %v747 = vsub.f32 %v331, %v491
        %v748 = vsub.f32 %v332, %v492
        %v749 = vsub.f32 %v333, %v493
        %v750 = vsub.f32 %v334, %v494
        %v751 = vsub.f32 %v335, %v495
        %v752 = vsub.f32 %v336, %v496
        %v753 = vsub.f32 %v337, %v497
        %v754 = vadd.f32 %v690, 1e-06
        %v755 = vadd.f32 %v691, 1e-06
        %v756 = vadd.f32 %v692, 1e-06
        %v757 = vadd.f32 %v693, 1e-06
        %v758 = vadd.f32 %v694, 1e-06
        %v759 = vadd.f32 %v695, 1e-06
        %v760 = vadd.f32 %v696, 1e-06
        %v761 = vadd.f32 %v697, 1e-06
        %v762 = vadd.f32 %v698, 1e-06
        %v763 = vadd.f32 %v699, 1e-06
        %v764 = vadd.f32 %v700, 1e-06
        %v765 = vadd.f32 %v701, 1e-06
        %v766 = vadd.f32 %v702, 1e-06
        %v767 = vadd.f32 %v703, 1e-06
        %v768 = vadd.f32 %v704, 1e-06
        %v769 = vadd.f32 %v705, 1e-06
        %v770 = vadd.f32 %v706, 1e-06
        %v771 = vadd.f32 %v707, 1e-06
        %v772 = vadd.f32 %v708, 1e-06
        %v773 = vadd.f32 %v709, 1e-06
        %v774 = vadd.f32 %v710, 1e-06
        %v775 = vadd.f32 %v711, 1e-06
        %v776 = vadd.f32 %v712, 1e-06
        %v777 = vadd.f32 %v713, 1e-06
        %v778 = vadd.f32 %v714, 1e-06
        %v779 = vadd.f32 %v715, 1e-06
        %v780 = vadd.f32 %v716, 1e-06
        %v781 = vadd.f32 %v717, 1e-06
        %v782 = vadd.f32 %v718, 1e-06
        %v783 = vadd.f32 %v719, 1e-06
        %v784 = vadd.f32 %v720, 1e-06
        %v785 = vadd.f32 %v721, 1e-06
        %v786 = vrsqrt.pop %v754
        %v787 = vrsqrt.pop %v755
        %v788 = vrsqrt.pop %v756
        %v789 = vrsqrt.pop %v757
        %v790 = vrsqrt.pop %v758
        %v791 = vrsqrt.pop %v759
        %v792 = vrsqrt.pop %v760
        %v793 = vrsqrt.pop %v761
        %v794 = vrsqrt.pop %v762
        %v795 = vrsqrt.pop %v763
        %v796 = vrsqrt.pop %v764
        %v797 = vrsqrt.pop %v765
        %v798 = vrsqrt.pop %v766
        %v799 = vrsqrt.pop %v767
        %v800 = vrsqrt.pop %v768
        %v801 = vrsqrt.pop %v769
        %v802 = vrsqrt.pop %v770
        %v803 = vrsqrt.pop %v771
        %v804 = vrsqrt.pop %v772
        %v805 = vrsqrt.pop %v773
        %v806 = vrsqrt.pop %v774
        %v807 = vrsqrt.pop %v775
        %v808 = vrsqrt.pop %v776
        %v809 = vrsqrt.pop %v777
        %v810 = vrsqrt.pop %v778
        %v811 = vrsqrt.pop %v779
        %v812 = vrsqrt.pop %v780
        %v813 = vrsqrt.pop %v781
        %v814 = vrsqrt.pop %v782
        %v815 = vrsqrt.pop %v783
        %v816 = vrsqrt.pop %v784
        %v817 = vrsqrt.pop %v785
        %v818 = vmul.f32 %v722, %v786
        %v819 = vmul.f32 %v723, %v787
        %v820 = vmul.f32 %v724, %v788
        %v821 = vmul.f32 %v725, %v789
        %v822 = vmul.f32 %v726, %v790
        %v823 = vmul.f32 %v727, %v791
        %v824 = vmul.f32 %v728, %v792
        %v825 = vmul.f32 %v729, %v793
        %v826 = vmul.f32 %v730, %v794
        %v827 = vmul.f32 %v731, %v795
        %v828 = vmul.f32 %v732, %v796
        %v829 = vmul.f32 %v733, %v797
        %v830 = vmul.f32 %v734, %v798
        %v831 = vmul.f32 %v735, %v799
        %v832 = vmul.f32 %v736, %v800
        %v833 = vmul.f32 %v737, %v801
        %v834 = vmul.f32 %v738, %v802
        %v835 = vmul.f32 %v739, %v803
        %v836 = vmul.f32 %v740, %v804
        %v837 = vmul.f32 %v741, %v805
        %v838 = vmul.f32 %v742, %v806
        %v839 = vmul.f32 %v743, %v807
        %v840 = vmul.f32 %v744, %v808
        %v841 = vmul.f32 %v745, %v809
        %v842 = vmul.f32 %v746, %v810
        %v843 = vmul.f32 %v747, %v811
        %v844 = vmul.f32 %v748, %v812
        %v845 = vmul.f32 %v749, %v813
        %v846 = vmul.f32 %v750, %v814
        %v847 = vmul.f32 %v751, %v815
        %v848 = vmul.f32 %v752, %v816
        %v849 = vmul.f32 %v753, %v817
        %v850 = vxor.u32 %v370, 2147483648
        %v851 = vxor.u32 %v371, 2147483648
        %v852 = vxor.u32 %v372, 2147483648
        %v853 = vxor.u32 %v373, 2147483648
        %v854 = vxor.u32 %v374, 2147483648
        %v855 = vxor.u32 %v375, 2147483648
        %v856 = vxor.u32 %v376, 2147483648
        %v857 = vxor.u32 %v377, 2147483648
        %v858 = vxor.u32 %v378, 2147483648
        %v859 = vxor.u32 %v379, 2147483648
        %v860 = vxor.u32 %v380, 2147483648
        %v861 = vxor.u32 %v381, 2147483648
        %v862 = vxor.u32 %v382, 2147483648
        %v863 = vxor.u32 %v383, 2147483648
        %v864 = vxor.u32 %v384, 2147483648
        %v865 = vxor.u32 %v385, 2147483648
        %v866 = vxor.u32 %v386, 2147483648
        %v867 = vxor.u32 %v387, 2147483648
        %v868 = vxor.u32 %v388, 2147483648
        %v869 = vxor.u32 %v389, 2147483648
        %v870 = vxor.u32 %v390, 2147483648
        %v871 = vxor.u32 %v391, 2147483648
        %v872 = vxor.u32 %v392, 2147483648
        %v873 = vxor.u32 %v393, 2147483648
        %v874 = vxor.u32 %v394, 2147483648
        %v875 = vxor.u32 %v395, 2147483648
        %v876 = vxor.u32 %v396, 2147483648
        %v877 = vxor.u32 %v397, 2147483648
        %v878 = vxor.u32 %v398, 2147483648
        %v879 = vxor.u32 %v399, 2147483648
        %v880 = vxor.u32 %v400, 2147483648
        %v881 = vxor.u32 %v401, 2147483648
        %v882 = vmul.f32 %v850, 1.442695
        %v883 = vpow.pop %v882
        %v884 = vmul.f32 %v851, 1.442695
        %v885 = vpow.pop %v884
        %v886 = vmul.f32 %v852, 1.442695
        %v887 = vpow.pop %v886
        %v888 = vmul.f32 %v853, 1.442695
        %v889 = vpow.pop %v888
        %v890 = vmul.f32 %v854, 1.442695
        %v891 = vpow.pop %v890
        %v892 = vmul.f32 %v855, 1.442695
        %v893 = vpow.pop %v892
        %v894 = vmul.f32 %v856, 1.442695
        %v895 = vpow.pop %v894
        %v896 = vmul.f32 %v857, 1.442695
        %v897 = vpow.pop %v896
        %v898 = vmul.f32 %v858, 1.442695
        %v899 = vpow.pop %v898
        %v900 = vmul.f32 %v859, 1.442695
        %v901 = vpow.pop %v900
        %v902 = vmul.f32 %v860, 1.442695
        %v903 = vpow.pop %v902
        %v904 = vmul.f32 %v861, 1.442695
        %v905 = vpow.pop %v904
        %v906 = vmul.f32 %v862, 1.442695
        %v907 = vpow.pop %v906
        %v908 = vmul.f32 %v863, 1.442695
        %v909 = vpow.pop %v908
        %v910 = vmul.f32 %v864, 1.442695
        %v911 = vpow.pop %v910
        %v912 = vmul.f32 %v865, 1.442695
        %v913 = vpow.pop %v912
        %v914 = vmul.f32 %v866, 1.442695
        %v915 = vpow.pop %v914
        %v916 = vmul.f32 %v867, 1.442695
        %v917 = vpow.pop %v916
        %v918 = vmul.f32 %v868, 1.442695
        %v919 = vpow.pop %v918
        %v920 = vmul.f32 %v869, 1.442695
        %v921 = vpow.pop %v920
        %v922 = vmul.f32 %v870, 1.442695
        %v923 = vpow.pop %v922
        %v924 = vmul.f32 %v871, 1.442695
        %v925 = vpow.pop %v924
        %v926 = vmul.f32 %v872, 1.442695
        %v927 = vpow.pop %v926
        %v928 = vmul.f32 %v873, 1.442695
        %v929 = vpow.pop %v928
        %v930 = vmul.f32 %v874, 1.442695
        %v931 = vpow.pop %v930
        %v932 = vmul.f32 %v875, 1.442695
        %v933 = vpow.pop %v932
        %v934 = vmul.f32 %v876, 1.442695
        %v935 = vpow.pop %v934
        %v936 = vmul.f32 %v877, 1.442695
        %v937 = vpow.pop %v936
        %v938 = vmul.f32 %v878, 1.442695
        %v939 = vpow.pop %v938
        %v940 = vmul.f32 %v879, 1.442695
        %v941 = vpow.pop %v940
        %v942 = vmul.f32 %v880, 1.442695
        %v943 = vpow.pop %v942
        %v944 = vmul.f32 %v881, 1.442695
        %v945 = vpow.pop %v944
        %v946 = vadd.f32 %v883, 1.0
        %v947 = vadd.f32 %v885, 1.0
        %v948 = vadd.f32 %v887, 1.0
        %v949 = vadd.f32 %v889, 1.0
        %v950 = vadd.f32 %v891, 1.0
        %v951 = vadd.f32 %v893, 1.0
        %v952 = vadd.f32 %v895, 1.0
        %v953 = vadd.f32 %v897, 1.0
        %v954 = vadd.f32 %v899, 1.0
        %v955 = vadd.f32 %v901, 1.0
        %v956 = vadd.f32 %v903, 1.0
        %v957 = vadd.f32 %v905, 1.0
        %v958 = vadd.f32 %v907, 1.0
        %v959 = vadd.f32 %v909, 1.0
        %v960 = vadd.f32 %v911, 1.0
        %v961 = vadd.f32 %v913, 1.0
        %v962 = vadd.f32 %v915, 1.0
        %v963 = vadd.f32 %v917, 1.0
        %v964 = vadd.f32 %v919, 1.0
        %v965 = vadd.f32 %v921, 1.0
        %v966 = vadd.f32 %v923, 1.0
        %v967 = vadd.f32 %v925, 1.0
        %v968 = vadd.f32 %v927, 1.0
        %v969 = vadd.f32 %v929, 1.0
        %v970 = vadd.f32 %v931, 1.0
        %v971 = vadd.f32 %v933, 1.0
        %v972 = vadd.f32 %v935, 1.0
        %v973 = vadd.f32 %v937, 1.0
        %v974 = vadd.f32 %v939, 1.0
        %v975 = vadd.f32 %v941, 1.0
        %v976 = vadd.f32 %v943, 1.0
        %v977 = vadd.f32 %v945, 1.0
        %v978 = vrcp.pop %v946
        %v979 = vmul.f32 1.0, %v978
        %v980 = vrcp.pop %v947
        %v981 = vmul.f32 1.0, %v980
        %v982 = vrcp.pop %v948
        %v983 = vmul.f32 1.0, %v982
        %v984 = vrcp.pop %v949
        %v985 = vmul.f32 1.0, %v984
        %v986 = vrcp.pop %v950
        %v987 = vmul.f32 1.0, %v986
        %v988 = vrcp.pop %v951
        %v989 = vmul.f32 1.0, %v988
        %v990 = vrcp.pop %v952
        %v991 = vmul.f32 1.0, %v990
        %v992 = vrcp.pop %v953
        %v993 = vmul.f32 1.0, %v992
        %v994 = vrcp.pop %v954
        %v995 = vmul.f32 1.0, %v994
        %v996 = vrcp.pop %v955
        %v997 = vmul.f32 1.0, %v996
        %v998 = vrcp.pop %v956
        %v999 = vmul.f32 1.0, %v998
        %v1000 = vrcp.pop %v957
        %v1001 = vmul.f32 1.0, %v1000
        %v1002 = vrcp.pop %v958
        %v1003 = vmul.f32 1.0, %v1002
        %v1004 = vrcp.pop %v959
        %v1005 = vmul.f32 1.0, %v1004
        %v1006 = vrcp.pop %v960
        %v1007 = vmul.f32 1.0, %v1006
        %v1008 = vrcp.pop %v961
        %v1009 = vmul.f32 1.0, %v1008
        %v1010 = vrcp.pop %v962
        %v1011 = vmul.f32 1.0, %v1010
        %v1012 = vrcp.pop %v963
        %v1013 = vmul.f32 1.0, %v1012
        %v1014 = vrcp.pop %v964
        %v1015 = vmul.f32 1.0, %v1014
        %v1016 = vrcp.pop %v965
        %v1017 = vmul.f32 1.0, %v1016
        %v1018 = vrcp.pop %v966
        %v1019 = vmul.f32 1.0, %v1018
        %v1020 = vrcp.pop %v967
        %v1021 = vmul.f32 1.0, %v1020
        %v1022 = vrcp.pop %v968
        %v1023 = vmul.f32 1.0, %v1022
        %v1024 = vrcp.pop %v969
        %v1025 = vmul.f32 1.0, %v1024
        %v1026 = vrcp.pop %v970
        %v1027 = vmul.f32 1.0, %v1026
        %v1028 = vrcp.pop %v971
        %v1029 = vmul.f32 1.0, %v1028
        %v1030 = vrcp.pop %v972
        %v1031 = vmul.f32 1.0, %v1030
        %v1032 = vrcp.pop %v973
        %v1033 = vmul.f32 1.0, %v1032
        %v1034 = vrcp.pop %v974
        %v1035 = vmul.f32 1.0, %v1034
        %v1036 = vrcp.pop %v975
        %v1037 = vmul.f32 1.0, %v1036
        %v1038 = vrcp.pop %v976
        %v1039 = vmul.f32 1.0, %v1038
        %v1040 = vrcp.pop %v977
        %v1041 = vmul.f32 1.0, %v1040
        %v1042 = vmul.f32 %v370, %v979
        %v1043 = vmul.f32 %v371, %v981
        %v1044 = vmul.f32 %v372, %v983
        %v1045 = vmul.f32 %v373, %v985
        %v1046 = vmul.f32 %v374, %v987
        %v1047 = vmul.f32 %v375, %v989
        %v1048 = vmul.f32 %v376, %v991
        %v1049 = vmul.f32 %v377, %v993
        %v1050 = vmul.f32 %v378, %v995
        %v1051 = vmul.f32 %v379, %v997
        %v1052 = vmul.f32 %v380, %v999
        %v1053 = vmul.f32 %v381, %v1001
        %v1054 = vmul.f32 %v382, %v1003
        %v1055 = vmul.f32 %v383, %v1005
        %v1056 = vmul.f32 %v384, %v1007
        %v1057 = vmul.f32 %v385, %v1009
        %v1058 = vmul.f32 %v386, %v1011
        %v1059 = vmul.f32 %v387, %v1013
        %v1060 = vmul.f32 %v388, %v1015
        %v1061 = vmul.f32 %v389, %v1017
        %v1062 = vmul.f32 %v390, %v1019
        %v1063 = vmul.f32 %v391, %v1021
        %v1064 = vmul.f32 %v392, %v1023
        %v1065 = vmul.f32 %v393, %v1025
        %v1066 = vmul.f32 %v394, %v1027
        %v1067 = vmul.f32 %v395, %v1029
        %v1068 = vmul.f32 %v396, %v1031
        %v1069 = vmul.f32 %v397, %v1033
        %v1070 = vmul.f32 %v398, %v1035
        %v1071 = vmul.f32 %v399, %v1037
        %v1072 = vmul.f32 %v400, %v1039
        %v1073 = vmul.f32 %v401, %v1041
        %v1074 = vpack.c.bf16 %v1043, %v1042
        %v1075 = vpack.c.bf16 %v1045, %v1044
        %v1076 = vpack.c.bf16 %v1047, %v1046
        %v1077 = vpack.c.bf16 %v1049, %v1048
        %v1078 = vpack.c.bf16 %v1051, %v1050
        %v1079 = vpack.c.bf16 %v1053, %v1052
        %v1080 = vpack.c.bf16 %v1055, %v1054
        %v1081 = vpack.c.bf16 %v1057, %v1056
        %v1082 = vpack.c.bf16 %v1059, %v1058
        %v1083 = vpack.c.bf16 %v1061, %v1060
        %v1084 = vpack.c.bf16 %v1063, %v1062
        %v1085 = vpack.c.bf16 %v1065, %v1064
        %v1086 = vpack.c.bf16 %v1067, %v1066
        %v1087 = vpack.c.bf16 %v1069, %v1068
        %v1088 = vpack.c.bf16 %v1071, %v1070
        %v1089 = vpack.c.bf16 %v1073, %v1072
        %v1090 = vld [vmem:[#allocation7] sm:$0xff]
        %v1091 = vld [vmem:[#allocation7 + $0x8] sm:$0xff]
        %v1092 = vld [vmem:[#allocation7 + $0x10] sm:$0xff]
        %v1093 = vld [vmem:[#allocation7 + $0x18] sm:$0xff]
        %v1094 = vld [vmem:[#allocation7 + $0x20] sm:$0xff]
        %v1095 = vld [vmem:[#allocation7 + $0x28] sm:$0xff]
        %v1096 = vld [vmem:[#allocation7 + $0x30] sm:$0xff]
        %v1097 = vld [vmem:[#allocation7 + $0x38] sm:$0xff]
        %v1098 = vld [vmem:[#allocation7 + $0x40] sm:$0xff]
        %v1099 = vld [vmem:[#allocation7 + $0x48] sm:$0xff]
        %v1100 = vld [vmem:[#allocation7 + $0x50] sm:$0xff]
        %v1101 = vld [vmem:[#allocation7 + $0x58] sm:$0xff]
        %v1102 = vld [vmem:[#allocation7 + $0x60] sm:$0xff]
        %v1103 = vld [vmem:[#allocation7 + $0x68] sm:$0xff]
        %v1104 = vld [vmem:[#allocation7 + $0x70] sm:$0xff]
        %v1105 = vld [vmem:[#allocation7 + $0x78] sm:$0xff]
        %v1106 = vld [vmem:[%s3] sm:$0x3]
        %v1108 = vlaneseq
        %v1109 = vshrl.u32 %v1108, 7
        %v1110 = vsub.s32 0, %v1109
        %v1111 = vrot.slane %v1106, %v1110
        %v1112 = vlaneseq
        %v1113 = vshrl.u32 %v1112, 7
        %v1114 = vsub.s32 1, %v1113
        %v1115 = vrot.slane %v1106, %v1114
        %v1134 = vunpack.c.l.b16 %v1090
        %v1135 = vunpack.c.h.b16 %v1090
        %v1136 = vunpack.c.l.b16 %v1091
        %v1137 = vunpack.c.h.b16 %v1091
        %v1138 = vunpack.c.l.b16 %v1092
        %v1139 = vunpack.c.h.b16 %v1092
        %v1140 = vunpack.c.l.b16 %v1093
        %v1141 = vunpack.c.h.b16 %v1093
        %v1142 = vunpack.c.l.b16 %v1094
        %v1143 = vunpack.c.h.b16 %v1094
        %v1144 = vunpack.c.l.b16 %v1095
        %v1145 = vunpack.c.h.b16 %v1095
        %v1146 = vunpack.c.l.b16 %v1096
        %v1147 = vunpack.c.h.b16 %v1096
        %v1148 = vunpack.c.l.b16 %v1097
        %v1149 = vunpack.c.h.b16 %v1097
        %v1150 = vunpack.c.l.b16 %v1098
        %v1151 = vunpack.c.h.b16 %v1098
        %v1152 = vunpack.c.l.b16 %v1099
        %v1153 = vunpack.c.h.b16 %v1099
        %v1154 = vunpack.c.l.b16 %v1100
        %v1155 = vunpack.c.h.b16 %v1100
        %v1156 = vunpack.c.l.b16 %v1101
        %v1157 = vunpack.c.h.b16 %v1101
        %v1158 = vunpack.c.l.b16 %v1102
        %v1159 = vunpack.c.h.b16 %v1102
        %v1160 = vunpack.c.l.b16 %v1103
        %v1161 = vunpack.c.h.b16 %v1103
        %v1162 = vunpack.c.l.b16 %v1104
        %v1163 = vunpack.c.h.b16 %v1104
        %v1164 = vunpack.c.l.b16 %v1105
        %v1165 = vunpack.c.h.b16 %v1105
        %v1166 = vpack.c.b16 %v1136, %v1134
        %v1167 = vpack.c.b16 %v1137, %v1135
        %v1168 = vpack.c.b16 %v1140, %v1138
        %v1169 = vpack.c.b16 %v1141, %v1139
        %v1170 = vpack.c.b16 %v1144, %v1142
        %v1171 = vpack.c.b16 %v1145, %v1143
        %v1172 = vpack.c.b16 %v1148, %v1146
        %v1173 = vpack.c.b16 %v1149, %v1147
        %v1174 = vpack.c.b16 %v1152, %v1150
        %v1175 = vpack.c.b16 %v1153, %v1151
        %v1176 = vpack.c.b16 %v1156, %v1154
        %v1177 = vpack.c.b16 %v1157, %v1155
        %v1178 = vpack.c.b16 %v1160, %v1158
        %v1179 = vpack.c.b16 %v1161, %v1159
        %v1180 = vpack.c.b16 %v1164, %v1162
        %v1181 = vpack.c.b16 %v1165, %v1163
        %1198 = vmatprep.subr.bf16.mxu0 %v1181
        %1199 = vmatpush1.bf16.msra.mxu0 %v1180
        %1200 = vmatprep.subr.bf16.mxu0 %v1179
        %1201 = vmatpush1.bf16.msra.mxu0 %v1178
        %1202 = vmatprep.subr.bf16.mxu0 %v1177
        %1203 = vmatpush1.bf16.msra.mxu0 %v1176
        %1204 = vmatprep.subr.bf16.mxu0 %v1175
        %1205 = vmatpush1.bf16.msra.mxu0 %v1174
        %1206 = vmatprep.subr.bf16.mxu0 %v1173
        %1207 = vmatpush1.bf16.msra.mxu0 %v1172
        %1208 = vmatprep.subr.bf16.mxu0 %v1171
        %1209 = vmatpush1.bf16.msra.mxu0 %v1170
        %1210 = vmatprep.subr.bf16.mxu0 %v1169
        %1211 = vmatpush1.bf16.msra.mxu0 %v1168
        %1212 = vmatprep.subr.bf16.mxu0 %v1167
        %1213 = vmatpush1.bf16.msra.mxu0 %v1166
        %1214 = vmatprep.subr.bf16.mxu0 0
        %1215 = vmatpush2.bf16.msra.mxu0 0
        %1216 = vmatprep.subr.bf16.mxu0 0
        %1217 = vmatpush2.bf16.msra.mxu0 0
        %1218 = vmatprep.subr.bf16.mxu0 0
        %1219 = vmatpush2.bf16.msra.mxu0 0
        %1220 = vmatprep.subr.bf16.mxu0 0
        %1221 = vmatpush2.bf16.msra.mxu0 0
        %1222 = vmatprep.subr.bf16.mxu0 0
        %1223 = vmatpush2.bf16.msra.mxu0 0
        %1224 = vmatprep.subr.bf16.mxu0 0
        %1225 = vmatpush2.bf16.msra.mxu0 0
        %1226 = vmatprep.subr.bf16.mxu0 0
        %1227 = vmatpush2.bf16.msra.mxu0 0
        %1228 = vmatprep.subr.bf16.mxu0 0
        %1229 = vmatpush2.bf16.msra.mxu0 0
        %1230 = vmatprep.mubr.bf16.mxu0 0
        %1231 = vmatmul.mubr.bf16.gmra.mxu0 %v1074
        %v1232 = vpop.f32.mrf.mxu0
        %v1233 = vadd.f32 %v1111, %v1232
        %v1234 = vpop.f32.mrf.mxu0
        %v1235 = vadd.f32 %v1115, %v1234
        %v1236 = vpop.f32.mrf.mxu0
        %v1237 = vadd.f32 %v1111, %v1236
        %v1238 = vpop.f32.mrf.mxu0
        %v1239 = vadd.f32 %v1115, %v1238
        %1240 = vmatprep.mubr.bf16.mxu0 0
        %1241 = vmatmul.mubr.bf16.gmra.mxu0 %v1075
        %v1242 = vpop.f32.mrf.mxu0
        %v1243 = vadd.f32 %v1111, %v1242
        %v1244 = vpop.f32.mrf.mxu0
        %v1245 = vadd.f32 %v1115, %v1244
        %v1246 = vpop.f32.mrf.mxu0
        %v1247 = vadd.f32 %v1111, %v1246
        %v1248 = vpop.f32.mrf.mxu0
        %v1249 = vadd.f32 %v1115, %v1248
        %1250 = vmatprep.mubr.bf16.mxu0 0
        %1251 = vmatmul.mubr.bf16.gmra.mxu0 %v1076
        %v1252 = vpop.f32.mrf.mxu0
        %v1253 = vadd.f32 %v1111, %v1252
        %v1254 = vpop.f32.mrf.mxu0
        %v1255 = vadd.f32 %v1115, %v1254
        %v1256 = vpop.f32.mrf.mxu0
        %v1257 = vadd.f32 %v1111, %v1256
        %v1258 = vpop.f32.mrf.mxu0
        %v1259 = vadd.f32 %v1115, %v1258
        %1260 = vmatprep.mubr.bf16.mxu0 0
        %1261 = vmatmul.mubr.bf16.gmra.mxu0 %v1077
        %v1262 = vpop.f32.mrf.mxu0
        %v1263 = vadd.f32 %v1111, %v1262
        %v1264 = vpop.f32.mrf.mxu0
        %v1265 = vadd.f32 %v1115, %v1264
        %v1266 = vpop.f32.mrf.mxu0
        %v1267 = vadd.f32 %v1111, %v1266
        %v1268 = vpop.f32.mrf.mxu0
        %v1269 = vadd.f32 %v1115, %v1268
        %1270 = vmatprep.mubr.bf16.mxu0 0
        %1271 = vmatmul.mubr.bf16.gmra.mxu0 %v1078
        %v1272 = vpop.f32.mrf.mxu0
        %v1273 = vadd.f32 %v1111, %v1272
        %v1274 = vpop.f32.mrf.mxu0
        %v1275 = vadd.f32 %v1115, %v1274
        %v1276 = vpop.f32.mrf.mxu0
        %v1277 = vadd.f32 %v1111, %v1276
        %v1278 = vpop.f32.mrf.mxu0
        %v1279 = vadd.f32 %v1115, %v1278
        %1280 = vmatprep.mubr.bf16.mxu0 0
        %1281 = vmatmul.mubr.bf16.gmra.mxu0 %v1079
        %v1282 = vpop.f32.mrf.mxu0
        %v1283 = vadd.f32 %v1111, %v1282
        %v1284 = vpop.f32.mrf.mxu0
        %v1285 = vadd.f32 %v1115, %v1284
        %v1286 = vpop.f32.mrf.mxu0
        %v1287 = vadd.f32 %v1111, %v1286
        %v1288 = vpop.f32.mrf.mxu0
        %v1289 = vadd.f32 %v1115, %v1288
        %1290 = vmatprep.mubr.bf16.mxu0 0
        %1291 = vmatmul.mubr.bf16.gmra.mxu0 %v1080
        %v1292 = vpop.f32.mrf.mxu0
        %v1293 = vadd.f32 %v1111, %v1292
        %v1294 = vpop.f32.mrf.mxu0
        %v1295 = vadd.f32 %v1115, %v1294
        %v1296 = vpop.f32.mrf.mxu0
        %v1297 = vadd.f32 %v1111, %v1296
        %v1298 = vpop.f32.mrf.mxu0
        %v1299 = vadd.f32 %v1115, %v1298
        %1300 = vmatprep.mubr.bf16.mxu0 0
        %1301 = vmatmul.mubr.bf16.gmra.mxu0 %v1081
        %v1302 = vpop.f32.mrf.mxu0
        %v1303 = vadd.f32 %v1111, %v1302
        %v1304 = vpop.f32.mrf.mxu0
        %v1305 = vadd.f32 %v1115, %v1304
        %v1306 = vpop.f32.mrf.mxu0
        %v1307 = vadd.f32 %v1111, %v1306
        %v1308 = vpop.f32.mrf.mxu0
        %v1309 = vadd.f32 %v1115, %v1308
        %1310 = vmatprep.mubr.bf16.mxu0 0
        %1311 = vmatmul.mubr.bf16.gmra.mxu0 %v1082
        %v1312 = vpop.f32.mrf.mxu0
        %v1313 = vadd.f32 %v1111, %v1312
        %v1314 = vpop.f32.mrf.mxu0
        %v1315 = vadd.f32 %v1115, %v1314
        %v1316 = vpop.f32.mrf.mxu0
        %v1317 = vadd.f32 %v1111, %v1316
        %v1318 = vpop.f32.mrf.mxu0
        %v1319 = vadd.f32 %v1115, %v1318
        %1320 = vmatprep.mubr.bf16.mxu0 0
        %1321 = vmatmul.mubr.bf16.gmra.mxu0 %v1083
        %v1322 = vpop.f32.mrf.mxu0
        %v1323 = vadd.f32 %v1111, %v1322
        %v1324 = vpop.f32.mrf.mxu0
        %v1325 = vadd.f32 %v1115, %v1324
        %v1326 = vpop.f32.mrf.mxu0
        %v1327 = vadd.f32 %v1111, %v1326
        %v1328 = vpop.f32.mrf.mxu0
        %v1329 = vadd.f32 %v1115, %v1328
        %1330 = vmatprep.mubr.bf16.mxu0 0
        %1331 = vmatmul.mubr.bf16.gmra.mxu0 %v1084
        %v1332 = vpop.f32.mrf.mxu0
        %v1333 = vadd.f32 %v1111, %v1332
        %v1334 = vpop.f32.mrf.mxu0
        %v1335 = vadd.f32 %v1115, %v1334
        %v1336 = vpop.f32.mrf.mxu0
        %v1337 = vadd.f32 %v1111, %v1336
        %v1338 = vpop.f32.mrf.mxu0
        %v1339 = vadd.f32 %v1115, %v1338
        %1340 = vmatprep.mubr.bf16.mxu0 0
        %1341 = vmatmul.mubr.bf16.gmra.mxu0 %v1085
        %v1342 = vpop.f32.mrf.mxu0
        %v1343 = vadd.f32 %v1111, %v1342
        %v1344 = vpop.f32.mrf.mxu0
        %v1345 = vadd.f32 %v1115, %v1344
        %v1346 = vpop.f32.mrf.mxu0
        %v1347 = vadd.f32 %v1111, %v1346
        %v1348 = vpop.f32.mrf.mxu0
        %v1349 = vadd.f32 %v1115, %v1348
        %1350 = vmatprep.mubr.bf16.mxu0 0
        %1351 = vmatmul.mubr.bf16.gmra.mxu0 %v1086
        %v1352 = vpop.f32.mrf.mxu0
        %v1353 = vadd.f32 %v1111, %v1352
        %v1354 = vpop.f32.mrf.mxu0
        %v1355 = vadd.f32 %v1115, %v1354
        %v1356 = vpop.f32.mrf.mxu0
        %v1357 = vadd.f32 %v1111, %v1356
        %v1358 = vpop.f32.mrf.mxu0
        %v1359 = vadd.f32 %v1115, %v1358
        %1360 = vmatprep.mubr.bf16.mxu0 0
        %1361 = vmatmul.mubr.bf16.gmra.mxu0 %v1087
        %v1362 = vpop.f32.mrf.mxu0
        %v1363 = vadd.f32 %v1111, %v1362
        %v1364 = vpop.f32.mrf.mxu0
        %v1365 = vadd.f32 %v1115, %v1364
        %v1366 = vpop.f32.mrf.mxu0
        %v1367 = vadd.f32 %v1111, %v1366
        %v1368 = vpop.f32.mrf.mxu0
        %v1369 = vadd.f32 %v1115, %v1368
        %1370 = vmatprep.mubr.bf16.mxu0 0
        %1371 = vmatmul.mubr.bf16.gmra.mxu0 %v1088
        %v1372 = vpop.f32.mrf.mxu0
        %v1373 = vadd.f32 %v1111, %v1372
        %v1374 = vpop.f32.mrf.mxu0
        %v1375 = vadd.f32 %v1115, %v1374
        %v1376 = vpop.f32.mrf.mxu0
        %v1377 = vadd.f32 %v1111, %v1376
        %v1378 = vpop.f32.mrf.mxu0
        %v1379 = vadd.f32 %v1115, %v1378
        %1380 = vmatprep.mubr.bf16.mxu0 0
        %1381 = vmatmul.mubr.bf16.gmra.mxu0 %v1089
        %v1382 = vpop.f32.mrf.mxu0
        %v1383 = vadd.f32 %v1111, %v1382
        %v1384 = vpop.f32.mrf.mxu0
        %v1385 = vadd.f32 %v1115, %v1384
        %v1386 = vpop.f32.mrf.mxu0
        %v1387 = vadd.f32 %v1111, %v1386
        %v1388 = vpop.f32.mrf.mxu0
        %v1389 = vadd.f32 %v1115, %v1388
        %1390 = vdwg.mxu0
        %v1391 = vmul.f32 %v818, %v1235
        %v1392 = vmul.f32 %v819, %v1239
        %v1393 = vmul.f32 %v820, %v1245
        %v1394 = vmul.f32 %v821, %v1249
        %v1395 = vmul.f32 %v822, %v1255
        %v1396 = vmul.f32 %v823, %v1259
        %v1397 = vmul.f32 %v824, %v1265
        %v1398 = vmul.f32 %v825, %v1269
        %v1399 = vmul.f32 %v826, %v1275
        %v1400 = vmul.f32 %v827, %v1279
        %v1401 = vmul.f32 %v828, %v1285
        %v1402 = vmul.f32 %v829, %v1289
        %v1403 = vmul.f32 %v830, %v1295
        %v1404 = vmul.f32 %v831, %v1299
        %v1405 = vmul.f32 %v832, %v1305
        %v1406 = vmul.f32 %v833, %v1309
        %v1407 = vmul.f32 %v834, %v1315
        %v1408 = vmul.f32 %v835, %v1319
        %v1409 = vmul.f32 %v836, %v1325
        %v1410 = vmul.f32 %v837, %v1329
        %v1411 = vmul.f32 %v838, %v1335
        %v1412 = vmul.f32 %v839, %v1339
        %v1413 = vmul.f32 %v840, %v1345
        %v1414 = vmul.f32 %v841, %v1349
        %v1415 = vmul.f32 %v842, %v1355
        %v1416 = vmul.f32 %v843, %v1359
        %v1417 = vmul.f32 %v844, %v1365
        %v1418 = vmul.f32 %v845, %v1369
        %v1419 = vmul.f32 %v846, %v1375
        %v1420 = vmul.f32 %v847, %v1379
        %v1421 = vmul.f32 %v848, %v1385
        %v1422 = vmul.f32 %v849, %v1389
        %v1423 = vadd.f32 %v1391, %v1233
        %v1424 = vadd.f32 %v1392, %v1237
        %v1425 = vadd.f32 %v1393, %v1243
        %v1426 = vadd.f32 %v1394, %v1247
        %v1427 = vadd.f32 %v1395, %v1253
        %v1428 = vadd.f32 %v1396, %v1257
        %v1429 = vadd.f32 %v1397, %v1263
        %v1430 = vadd.f32 %v1398, %v1267
        %v1431 = vadd.f32 %v1399, %v1273
        %v1432 = vadd.f32 %v1400, %v1277
        %v1433 = vadd.f32 %v1401, %v1283
        %v1434 = vadd.f32 %v1402, %v1287
        %v1435 = vadd.f32 %v1403, %v1293
        %v1436 = vadd.f32 %v1404, %v1297
        %v1437 = vadd.f32 %v1405, %v1303
        %v1438 = vadd.f32 %v1406, %v1307
        %v1439 = vadd.f32 %v1407, %v1313
        %v1440 = vadd.f32 %v1408, %v1317
        %v1441 = vadd.f32 %v1409, %v1323
        %v1442 = vadd.f32 %v1410, %v1327
        %v1443 = vadd.f32 %v1411, %v1333
        %v1444 = vadd.f32 %v1412, %v1337
        %v1445 = vadd.f32 %v1413, %v1343
        %v1446 = vadd.f32 %v1414, %v1347
        %v1447 = vadd.f32 %v1415, %v1353
        %v1448 = vadd.f32 %v1416, %v1357
        %v1449 = vadd.f32 %v1417, %v1363
        %v1450 = vadd.f32 %v1418, %v1367
        %v1451 = vadd.f32 %v1419, %v1373
        %v1452 = vadd.f32 %v1420, %v1377
        %v1453 = vadd.f32 %v1421, %v1383
        %v1454 = vadd.f32 %v1422, %v1387
        %v1455 = vpack.c.bf16 %v1424, %v1423
        %v1456 = vpack.c.bf16 %v1426, %v1425
        %v1457 = vpack.c.bf16 %v1428, %v1427
        %v1458 = vpack.c.bf16 %v1430, %v1429
        %v1459 = vpack.c.bf16 %v1432, %v1431
        %v1460 = vpack.c.bf16 %v1434, %v1433
        %v1461 = vpack.c.bf16 %v1436, %v1435
        %v1462 = vpack.c.bf16 %v1438, %v1437
        %v1463 = vpack.c.bf16 %v1440, %v1439
        %v1464 = vpack.c.bf16 %v1442, %v1441
        %v1465 = vpack.c.bf16 %v1444, %v1443
        %v1466 = vpack.c.bf16 %v1446, %v1445
        %v1467 = vpack.c.bf16 %v1448, %v1447
        %v1468 = vpack.c.bf16 %v1450, %v1449
        %v1469 = vpack.c.bf16 %v1452, %v1451
        %v1470 = vpack.c.bf16 %v1454, %v1453
        %v1487 = vunpack.c.l.b16 %v1455
        %v1488 = vunpack.c.h.b16 %v1455
        %v1489 = vunpack.c.l.b16 %v1456
        %v1490 = vunpack.c.h.b16 %v1456
        %v1491 = vunpack.c.l.b16 %v1457
        %v1492 = vunpack.c.h.b16 %v1457
        %v1493 = vunpack.c.l.b16 %v1458
        %v1494 = vunpack.c.h.b16 %v1458
        %v1495 = vunpack.c.l.b16 %v1459
        %v1496 = vunpack.c.h.b16 %v1459
        %v1497 = vunpack.c.l.b16 %v1460
        %v1498 = vunpack.c.h.b16 %v1460
        %v1499 = vunpack.c.l.b16 %v1461
        %v1500 = vunpack.c.h.b16 %v1461
        %v1501 = vunpack.c.l.b16 %v1462
        %v1502 = vunpack.c.h.b16 %v1462
        %v1503 = vunpack.c.l.b16 %v1463
        %v1504 = vunpack.c.h.b16 %v1463
        %v1505 = vunpack.c.l.b16 %v1464
        %v1506 = vunpack.c.h.b16 %v1464
        %v1507 = vunpack.c.l.b16 %v1465
        %v1508 = vunpack.c.h.b16 %v1465
        %v1509 = vunpack.c.l.b16 %v1466
        %v1510 = vunpack.c.h.b16 %v1466
        %v1511 = vunpack.c.l.b16 %v1467
        %v1512 = vunpack.c.h.b16 %v1467
        %v1513 = vunpack.c.l.b16 %v1468
        %v1514 = vunpack.c.h.b16 %v1468
        %v1515 = vunpack.c.l.b16 %v1469
        %v1516 = vunpack.c.h.b16 %v1469
        %v1517 = vunpack.c.l.b16 %v1470
        %v1518 = vunpack.c.h.b16 %v1470
        %v1519 = vpack.c.b16 %v1487, %v1487
        %v1520 = vpack.c.b16 %v1488, %v1488
        %v1521 = vpack.c.b16 %v1489, %v1489
        %v1522 = vpack.c.b16 %v1490, %v1490
        %v1523 = vpack.c.b16 %v1491, %v1491
        %v1524 = vpack.c.b16 %v1492, %v1492
        %v1525 = vpack.c.b16 %v1493, %v1493
        %v1526 = vpack.c.b16 %v1494, %v1494
        %v1527 = vpack.c.b16 %v1495, %v1495
        %v1528 = vpack.c.b16 %v1496, %v1496
        %v1529 = vpack.c.b16 %v1497, %v1497
        %v1530 = vpack.c.b16 %v1498, %v1498
        %v1531 = vpack.c.b16 %v1499, %v1499
        %v1532 = vpack.c.b16 %v1500, %v1500
        %v1533 = vpack.c.b16 %v1501, %v1501
        %v1534 = vpack.c.b16 %v1502, %v1502
        %v1535 = vpack.c.b16 %v1503, %v1503
        %v1536 = vpack.c.b16 %v1504, %v1504
        %v1537 = vpack.c.b16 %v1505, %v1505
        %v1538 = vpack.c.b16 %v1506, %v1506
        %v1539 = vpack.c.b16 %v1507, %v1507
        %v1540 = vpack.c.b16 %v1508, %v1508
        %v1541 = vpack.c.b16 %v1509, %v1509
        %v1542 = vpack.c.b16 %v1510, %v1510
        %v1543 = vpack.c.b16 %v1511, %v1511
        %v1544 = vpack.c.b16 %v1512, %v1512
        %v1545 = vpack.c.b16 %v1513, %v1513
        %v1546 = vpack.c.b16 %v1514, %v1514
        %v1547 = vpack.c.b16 %v1515, %v1515
        %v1548 = vpack.c.b16 %v1516, %v1516
        %v1549 = vpack.c.b16 %v1517, %v1517
        %v1550 = vpack.c.b16 %v1518, %v1518
        %1583 = vst [vmem:[%s269] sm:$0xf] %v1519
        %1584 = vst [vmem:[%s269 + $0x4] sm:$0xf] %v1520
        %1585 = vst [vmem:[%s269 + $0x8] sm:$0xf] %v1521
        %1586 = vst [vmem:[%s269 + $0xc] sm:$0xf] %v1522
        %1587 = vst [vmem:[%s269 + $0x10] sm:$0xf] %v1523
        %1588 = vst [vmem:[%s269 + $0x14] sm:$0xf] %v1524
        %1589 = vst [vmem:[%s269 + $0x18] sm:$0xf] %v1525
        %1590 = vst [vmem:[%s269 + $0x1c] sm:$0xf] %v1526
        %1591 = vst [vmem:[%s269 + $0x20] sm:$0xf] %v1527
        %1592 = vst [vmem:[%s269 + $0x24] sm:$0xf] %v1528
        %1593 = vst [vmem:[%s269 + $0x28] sm:$0xf] %v1529
        %1594 = vst [vmem:[%s269 + $0x2c] sm:$0xf] %v1530
        %1595 = vst [vmem:[%s269 + $0x30] sm:$0xf] %v1531
        %1596 = vst [vmem:[%s269 + $0x34] sm:$0xf] %v1532
        %1597 = vst [vmem:[%s269 + $0x38] sm:$0xf] %v1533
        %1598 = vst [vmem:[%s269 + $0x3c] sm:$0xf] %v1534
        %1599 = vst [vmem:[%s269 + $0x40] sm:$0xf] %v1535
        %1600 = vst [vmem:[%s269 + $0x44] sm:$0xf] %v1536
        %1601 = vst [vmem:[%s269 + $0x48] sm:$0xf] %v1537
        %1602 = vst [vmem:[%s269 + $0x4c] sm:$0xf] %v1538
        %1603 = vst [vmem:[%s269 + $0x50] sm:$0xf] %v1539
        %1604 = vst [vmem:[%s269 + $0x54] sm:$0xf] %v1540
        %1605 = vst [vmem:[%s269 + $0x58] sm:$0xf] %v1541
        %1606 = vst [vmem:[%s269 + $0x5c] sm:$0xf] %v1542
        %1607 = vst [vmem:[%s269 + $0x60] sm:$0xf] %v1543
        %1608 = vst [vmem:[%s269 + $0x64] sm:$0xf] %v1544
        %1609 = vst [vmem:[%s269 + $0x68] sm:$0xf] %v1545
        %1610 = vst [vmem:[%s269 + $0x6c] sm:$0xf] %v1546
        %1611 = vst [vmem:[%s269 + $0x70] sm:$0xf] %v1547
        %1612 = vst [vmem:[%s269 + $0x74] sm:$0xf] %v1548
        %1613 = vst [vmem:[%s269 + $0x78] sm:$0xf] %v1549
        %1614 = vst [vmem:[%s269 + $0x7c] sm:$0xf] %v1550
        %s1615 = sand.u32 %s126, 1
        %s1616 = scalar_lea.sflag [#allocation4], %s1615
        %s1617 = sand.u32 %s126, 1
        %s1618 = smul.addr %s1617, 128
        %s1619 = scalar_lea.vmem [#allocation8], %s1618
        // Predicated region
        $region49: #{tpu_custom_call.1} parent=35 // pred_check
          %p1620 = pneg %p136
        $region50: #{tpu_custom_call.1} parent=35 // pred_check_branch
          %1622 = sbr.rel (%p1620) target = $region52
        $region51: #{tpu_custom_call.1} parent=35 // pred_region
          %s1623 = smul.u32 32, %s24
          %s1625 = ssub.s32 2048, 2048
          %1626 = vsyncadd %s1616, %s1625
          %s1627 = smul.addr %s1623, 64
          %s1628 = scalar_lea.hbm %s4, %s1627
          %s1629 = sshll.u32 %s1619, 4
          %s1630 = int_to_ptr.vmem [resolvable:$true] %s1629
          %1635 = dma.vmem_to_hbm [thread:$0]  %s1630, 2048, %s1628, %s1616, 64, 64, 4
        $region52: #{tpu_custom_call.1} parent=35 // pred_fallthru
          _
      $region36: #{tpu_custom_call.1} parent=5 // pred_fallthru
        _
      %p1636 = scmp.le.s32.totalorder 2, %s19
      // Predicated region
      $region53: #{tpu_custom_call.1} parent=5 // pred_check
        %p1637 = pneg %p1636
      $region54: #{tpu_custom_call.1} parent=5 // pred_check_branch
        %1639 = sbr.rel (%p1637) target = $region56
      $region55: #{tpu_custom_call.1} parent=5 // pred_region
        %s1640 = ssub.s32 %s19, 2
        // Predicated region
        $region57: #{tpu_custom_call.1} parent=55 // pred_check
          %p1641 = pneg %p142
        $region58: #{tpu_custom_call.1} parent=55 // pred_check_branch
          %1643 = sbr.rel (%p1641) target = $region60
        $region59: #{tpu_custom_call.1} parent=55 // pred_region
          %s1644 = sand.u32 %s127, 1
          %s1645 = scalar_lea.sflag [#allocation4], %s1644
          %s1646 = sand.u32 %s127, 1
          %s1647 = smul.addr %s1646, 128
          %s1648 = scalar_lea.vmem [#allocation8], %s1647
          %1649 = dma.done %s1645, 2048
        $region60: #{tpu_custom_call.1} parent=55 // pred_fallthru
          _
      $region56: #{tpu_custom_call.1} parent=5 // pred_fallthru
        _
    $region6: #{tpu_custom_call.1} parent=1 // loop_footer
      %s23 = sadd.s32 1, %s19
    $region7: #{tpu_custom_call.1} parent=1 // loop_footer_branch
      %18 = sbr.rel target = $region3
    $region8: #{tpu_custom_call.1} parent=1 // loop_exit
      _
    %1650 = vsyncpa [#allocation3], 1
    %s1651 = scalar_lea.sflag [#allocation3], 1
    %1652 = vsyncpa %s1651, 1
    %1653 = vsyncpa [#allocation6], 1
    %s1654 = scalar_lea.sflag [#allocation6], 1
    %1655 = vsyncpa %s1654, 1
    %1656 = vsyncpa [#allocation4], 1
    %s1657 = scalar_lea.sflag [#allocation4], 1
    %1658 = vsyncpa %s1657, 1

</llo_original>
